<compile_context>
chip_gen: v7x
topology: tpu7x:2x2x1
jax: 0.10.0
libtpu: 0.0.40
codegen_flags: <defaults>
</compile_context>

<pallas_src>
import jax
import jax.numpy as jnp
from jax.experimental import pallas as pl
from jax.experimental.pallas import tpu as pltpu


# ----------------------------------------------------------------------------
# Pallas kernel: one (batch, query-tile) grid step
# ----------------------------------------------------------------------------
def _self_attention_kernel(x_ref, phi_ref, g_ref, wt_ref, wo_ref, gamma_ref,
                           out_ref):
    # x_ref    : (1, C, TQ)       f32   query / residual tile (channel-major)
    # phi_ref  : (1, HW4, C8)     bf16  pooled keys, constant over the q axis
    # g_ref    : (1, C2+1, HW4)   bf16  pooled values with a ones row appended
    #                                   (row C2) so the PV matmul also yields
    #                                   the softmax denominator
    # wt_ref   : (C8, C)          bf16  theta weight (out, in)
    # wo_ref   : (C, C2)          bf16  o weight (out, in)
    # gamma_ref: (1, 1)           f32   SMEM scalar
    # out_ref  : (1, C, TQ)       f32
    C2 = g_ref.shape[1] - 1

    x = x_ref[0]                                               # (C, TQ) f32
    x_bf = x.astype(jnp.bfloat16)

    # theta projection: (C8, C) x (C, TQ) -> (C8, TQ)
    theta = jnp.dot(wt_ref[...], x_bf,
                    preferred_element_type=jnp.float32)

    # attention logits: (HW4, C8) x (C8, TQ) -> (HW4, TQ); softmax runs over
    # the pooled-key axis (axis 0).
    s = jnp.dot(phi_ref[0], theta.astype(jnp.bfloat16),
                preferred_element_type=jnp.float32)

    m = jnp.max(s, axis=0, keepdims=True)                      # (1, TQ)
    p = jnp.exp(s - m).astype(jnp.bfloat16)                    # (HW4, TQ)

    # PV matmul with the denominator folded in via the ones row of g:
    # (C2+1, HW4) x (HW4, TQ) -> (C2+1, TQ); last row is the row-sum of p.
    ag = jnp.dot(g_ref[0], p, preferred_element_type=jnp.float32)
    denom = ag[C2:C2 + 1, :]                                   # (1, TQ), >= 1
    attn_g = ag[:C2, :] * pl.reciprocal(denom, approx=True)    # (C2, TQ)

    # output projection: (C, C2) x (C2, TQ) -> (C, TQ)
    o = jnp.dot(wo_ref[...], attn_g.astype(jnp.bfloat16),
                preferred_element_type=jnp.float32)

    out_ref[0] = x + gamma_ref[0, 0] * o


# ----------------------------------------------------------------------------
# Wrapper: hoisted pooled projections (plain XLA) + pallas_call
# ----------------------------------------------------------------------------
def _pick_query_tile(HW):
    # Largest MXU-aligned query tile dividing HW, capped at 512 so the
    # (HW4, TQ) logits/probability temporaries stay modest even on v7x's
    # 64 MiB VMEM.  (v6e/v5e could go to 1024 when HW permits.)
    for cand in (512, 256, 128):
        if HW % cand == 0:
            return cand
    return HW  # tiny images: one tile per batch


def _vmem_limit_bytes():
    # ~100 MiB on 128 MiB chips (v5e/v6e), ~54 MiB on v7x (64 MiB VMEM/TC).
    try:
        cap = pltpu.get_tpu_info().vmem_capacity_bytes
    except Exception:
        cap = 64 * 1024 * 1024
    return min(int(cap * 0.85), 100 * 1024 * 1024)


def _pooled_projections(x_flat, wp, wg, H, W):
    """Hoisted 1x1 conv + 2x2 max-pool for phi and g (plain XLA, once/batch).

    x_flat: (N, C, HW) f32; wp: (C8, C); wg: (C2, C).
    Returns phi_t (N, HW4, C8) bf16 and g_aug (N, C2+1, HW4) bf16
    (g with a ones row appended for the in-kernel denominator fold).
    """
    N = x_flat.shape[0]
    C8, C2 = wp.shape[0], wg.shape[0]
    HW4 = (H // 2) * (W // 2)
    w_pg = jnp.concatenate([wp, wg], axis=0)                   # (C8+C2, C)
    pg = jnp.einsum('oc,ncl->nol', w_pg, x_flat)               # (N, C8+C2, HW)
    # 2x2 max-pool, stride 2, on the raster (H, W) layout — conv THEN pool,
    # exactly like the PyTorch reference.
    pg = pg.reshape(N, C8 + C2, H // 2, 2, W // 2, 2)
    pg = jnp.max(pg, axis=(3, 5)).reshape(N, C8 + C2, HW4)
    phi = pg[:, :C8]                                           # (N, C8, HW4)
    g = pg[:, C8:]                                             # (N, C2, HW4)
    phi_t = jnp.transpose(phi, (0, 2, 1)).astype(jnp.bfloat16)  # (N, HW4, C8)
    ones = jnp.ones((N, 1, HW4), dtype=phi.dtype)
    g_aug = jnp.concatenate([g, ones], axis=1).astype(jnp.bfloat16)
    return phi_t, g_aug


def self_attention_pallas(x_nchw, wt, wp, wg, wo, gamma, *, tq=None):
    """x_nchw: (N, C, H, W).  wt/wp/wg/wo are (out, in) 1x1 conv weights."""
    N, C, H, W = x_nchw.shape
    assert H % 2 == 0 and W % 2 == 0, "2x2 max-pool (stride 2) needs even H, W"
    assert C >= 8 and C % 8 == 0
    HW = H * W
    HW4 = HW // 4
    C8, C2 = C >> 3, C >> 1
    assert wt.shape == (C8, C) and wp.shape == (C8, C)
    assert wg.shape == (C2, C) and wo.shape == (C, C2)
    TQ = tq if tq is not None else _pick_query_tile(HW)
    assert HW % TQ == 0

    # Channel-major: a reshape only, no transpose / extra HBM pass.
    x_flat = x_nchw.reshape(N, C, HW).astype(jnp.float32)

    # Hoisted pooled phi/g projections (once per batch, outside the grid loop).
    phi_t, g_aug = _pooled_projections(x_flat, wp, wg, H, W)

    wt_b = wt.astype(jnp.bfloat16)                             # (C8, C)
    wo_b = wo.astype(jnp.bfloat16)                             # (C, C2)
    gamma_arr = jnp.reshape(jnp.asarray(gamma, dtype=jnp.float32), (1, 1))

    flops = 2 * N * HW * (C * C8 + HW4 * C8 + HW4 * (C2 + 1) + C2 * C)
    bytes_accessed = (N * HW * C * 4 * 2                       # x in + out (f32)
                      + N * HW4 * (C8 + C2 + 1) * 2            # phi_t + g_aug
                      + (C8 * C + C * C2) * 2 + 8)             # weights + gamma
    cost = pl.CostEstimate(flops=flops, transcendentals=N * HW * HW4,
                           bytes_accessed=bytes_accessed)

    # TODO(synk): the constant-index blocks (phi_t, g_aug, weights) are still
    # default double-buffered; pipeline_mode=pl.Buffered(1) would save a few
    # MiB of VMEM on v7x once that knob is universally available.
    out_flat = pl.pallas_call(
        _self_attention_kernel,
        out_shape=jax.ShapeDtypeStruct((N, C, HW), jnp.float32),
        grid=(N, HW // TQ),
        in_specs=[
            pl.BlockSpec((1, C, TQ), lambda n, q: (n, 0, q)),
            pl.BlockSpec((1, HW4, C8), lambda n, q: (n, 0, 0)),
            pl.BlockSpec((1, C2 + 1, HW4), lambda n, q: (n, 0, 0)),
            pl.BlockSpec((C8, C), lambda n, q: (0, 0)),
            pl.BlockSpec((C, C2), lambda n, q: (0, 0)),
            pl.BlockSpec(memory_space=pltpu.MemorySpace.SMEM),
        ],
        out_specs=pl.BlockSpec((1, C, TQ), lambda n, q: (n, 0, q)),
        compiler_params=pltpu.CompilerParams(
            dimension_semantics=("parallel", "parallel"),
            vmem_limit_bytes=_vmem_limit_bytes(),
        ),
        cost_estimate=cost,
    )(x_flat, phi_t, g_aug, wt_b, wo_b, gamma_arr)

    return out_flat.reshape(N, C, H, W)


# ----------------------------------------------------------------------------
# Parameter setup (plain JAX glue): spectral normalization (1 power iteration)
# ----------------------------------------------------------------------------
def spectral_norm_weight(w, u, num_iters=1, eps=1e-12):
    """w: (out, in) flattened conv weight, u: (1, out).  Mirrors SpectralNorm."""
    def _normalize(v):
        return v / jnp.maximum(jnp.linalg.norm(v), eps)
    v = None
    for _ in range(num_iters):
        v = _normalize(u @ w)        # (1, in)
        u = _normalize(v @ w.T)      # (1, out)
    sigma = (u @ (w @ v.T))[0, 0]
    return w / sigma


# ----------------------------------------------------------------------------
# Pure-JAX reference for correctness checking
# ----------------------------------------------------------------------------
def _maxpool2(y):
    N, C, H, W = y.shape
    return jnp.max(y.reshape(N, C, H // 2, 2, W // 2, 2), axis=(3, 5))


def self_attention_reference(x, wt, wp, wg, wo, gamma):
    """x: NCHW; wt/wp/wg/wo are (out, in) flattened 1x1 conv weights."""
    N, C, H, W = x.shape
    HW, HW4 = H * W, (H * W) // 4
    theta = jnp.einsum('oc,nchw->nohw', wt, x).reshape(N, C >> 3, HW)
    phi = _maxpool2(jnp.einsum('oc,nchw->nohw', wp, x)).reshape(N, C >> 3, HW4)
    g = _maxpool2(jnp.einsum('oc,nchw->nohw', wg, x)).reshape(N, C >> 1, HW4)
    attn = jnp.einsum('ncq,nck->nqk', theta, phi)          # (N, HW, HW4)
    attn = jax.nn.softmax(attn, axis=-1)
    attn_g = jnp.einsum('nck,nqk->ncq', g, attn).reshape(N, C >> 1, H, W)
    attn_g = jnp.einsum('oc,nchw->nohw', wo, attn_g)
    return x + gamma * attn_g


if __name__ == "__main__":
    key = jax.random.PRNGKey(0)
    N, C, H, W = 2, 32, 32, 32        # num_feat = 32 -> C/8 = 4, C/2 = 16
    C8, C2 = C >> 3, C >> 1

    keys = jax.random.split(key, 9)
    x = jax.random.normal(keys[0], (N, C, H, W), dtype=jnp.float32)

    # Raw 1x1 conv weights (out, in) — kernel spatial dims are 1x1 so flattened.
    wt_raw = jax.random.normal(keys[1], (C8, C), dtype=jnp.float32) * 0.1
    wp_raw = jax.random.normal(keys[2], (C8, C), dtype=jnp.float32) * 0.1
    wg_raw = jax.random.normal(keys[3], (C2, C), dtype=jnp.float32) * 0.1
    wo_raw = jax.random.normal(keys[4], (C, C2), dtype=jnp.float32) * 0.1

    # Spectral-norm power-iteration buffers sn_u ~ randn(1, out_channels).
    u_t = jax.random.normal(keys[5], (1, C8), dtype=jnp.float32)
    u_p = jax.random.normal(keys[6], (1, C8), dtype=jnp.float32)
    u_g = jax.random.normal(keys[7], (1, C2), dtype=jnp.float32)
    u_o = jax.random.normal(keys[8], (1, C), dtype=jnp.float32)

    wt = spectral_norm_weight(wt_raw, u_t)
    wp = spectral_norm_weight(wp_raw, u_p)
    wg = spectral_norm_weight(wg_raw, u_g)
    wo = spectral_norm_weight(wo_raw, u_o)

    # PyTorch inits gamma to 0.0 (output == x); use a nonzero deterministic
    # value so the attention path is actually exercised.
    gamma = jnp.float32(0.5)

    out = self_attention_pallas(x, wt, wp, wg, wo, gamma)
    out = jax.block_until_ready(out)

    ref = self_attention_reference(x, wt, wp, wg, wo, gamma)
    assert out.shape == (N, C, H, W)
    # bf16 MXU operands + approx reciprocal -> relaxed tolerance vs f32 reference.
    err = jnp.max(jnp.abs(out - ref))
    assert jnp.allclose(out, ref, rtol=2e-2, atol=2e-2), f"max abs err = {err}"

    print("KERNEL_OK")
</pallas_src>

<mosaic_0001>
module attributes {stable_mosaic.version = 11 : i64} {
  func.func @_self_attention_kernel(%arg0: i32, %arg1: i32, %arg2: memref<1x32x512xf32, #tpu.memory_space<vmem>>, %arg3: memref<1x256x4xbf16, #tpu.memory_space<vmem>>, %arg4: memref<1x17x256xbf16, #tpu.memory_space<vmem>>, %arg5: memref<4x32xbf16, #tpu.memory_space<vmem>>, %arg6: memref<32x16xbf16, #tpu.memory_space<vmem>>, %arg7: memref<1x1xf32, #tpu.memory_space<smem>>, %arg8: memref<1x32x512xf32, #tpu.memory_space<vmem>>) attributes {dimension_semantics = [#tpu.dimension_semantics<parallel>, #tpu.dimension_semantics<parallel>], iteration_bounds = array<i64: 2, 2>, scalar_prefetch = 0 : i64, scratch_operands = 0 : i64, tpu.core_type = #tpu.core_type<tc>, window_params = [{transform_indices = @transform_0, window_bounds = array<i64: 1, 32, 512>}, {transform_indices = @transform_1, window_bounds = array<i64: 1, 256, 4>}, {transform_indices = @transform_2, window_bounds = array<i64: 1, 17, 256>}, {pipeline_mode = #tpu.pipeline_mode<synchronous>, transform_indices = @transform_3, window_bounds = array<i64: 4, 32>}, {pipeline_mode = #tpu.pipeline_mode<synchronous>, transform_indices = @transform_4, window_bounds = array<i64: 32, 16>}, {transform_indices = @transform_5, window_bounds = array<i64: 1, 1>}, {transform_indices = @transform_6, window_bounds = array<i64: 1, 32, 512>}]} {
    %c0 = arith.constant 0 : index
    %c0_0 = arith.constant 0 : index
    %c0_1 = arith.constant 0 : index
    %0 = vector.load %arg2[%c0, %c0_0, %c0_1] : memref<1x32x512xf32, #tpu.memory_space<vmem>>, vector<1x32x512xf32>
    %1 = vector.shape_cast %0 : vector<1x32x512xf32> to vector<32x512xf32>
    %2 = arith.truncf %1 : vector<32x512xf32> to vector<32x512xbf16>
    %c0_2 = arith.constant 0 : index
    %c0_3 = arith.constant 0 : index
    %3 = vector.load %arg5[%c0_2, %c0_3] : memref<4x32xbf16, #tpu.memory_space<vmem>>, vector<4x32xbf16>
    %cst = arith.constant dense<0.000000e+00> : vector<4x512xf32>
    %4 = tpu.matmul %3, %2, %cst {dimension_numbers = #tpu.dot_dimension_numbers<[1], [0], [0], [1], [0, 0, 1, 1], [], []>} : vector<4x32xbf16>, vector<32x512xbf16>, vector<4x512xf32> -> vector<4x512xf32>
    %c0_4 = arith.constant 0 : index
    %c0_5 = arith.constant 0 : index
    %c0_6 = arith.constant 0 : index
    %5 = vector.load %arg3[%c0_4, %c0_5, %c0_6] : memref<1x256x4xbf16, #tpu.memory_space<vmem>>, vector<1x256x4xbf16>
    %6 = vector.shape_cast %5 : vector<1x256x4xbf16> to vector<256x4xbf16>
    %7 = arith.truncf %4 : vector<4x512xf32> to vector<4x512xbf16>
    %cst_7 = arith.constant dense<0.000000e+00> : vector<256x512xf32>
    %8 = tpu.matmul %6, %7, %cst_7 {dimension_numbers = #tpu.dot_dimension_numbers<[1], [0], [0], [1], [0, 0, 1, 1], [], []>} : vector<256x4xbf16>, vector<4x512xbf16>, vector<256x512xf32> -> vector<256x512xf32>
    %cst_8 = arith.constant dense<0xFF800000> : vector<512xf32>
    %9 = vector.multi_reduction <maximumf>, %8, %cst_8 [0] : vector<256x512xf32> to vector<512xf32>
    %10 = vector.shape_cast %9 : vector<512xf32> to vector<1x512xf32>
    %11 = vector.broadcast %10 : vector<1x512xf32> to vector<256x512xf32>
    %12 = arith.subf %8, %11 : vector<256x512xf32>
    %13 = math.exp %12 : vector<256x512xf32>
    %14 = arith.truncf %13 : vector<256x512xf32> to vector<256x512xbf16>
    %c0_9 = arith.constant 0 : index
    %c0_10 = arith.constant 0 : index
    %c0_11 = arith.constant 0 : index
    %15 = vector.load %arg4[%c0_9, %c0_10, %c0_11] : memref<1x17x256xbf16, #tpu.memory_space<vmem>>, vector<1x17x256xbf16>
    %16 = vector.shape_cast %15 : vector<1x17x256xbf16> to vector<17x256xbf16>
    %cst_12 = arith.constant dense<0.000000e+00> : vector<17x512xf32>
    %17 = tpu.matmul %16, %14, %cst_12 {dimension_numbers = #tpu.dot_dimension_numbers<[1], [0], [0], [1], [0, 0, 1, 1], [], []>} : vector<17x256xbf16>, vector<256x512xbf16>, vector<17x512xf32> -> vector<17x512xf32>
    %18 = vector.extract_strided_slice %17 {offsets = [16, 0], sizes = [1, 512], strides = [1, 1]} : vector<17x512xf32> to vector<1x512xf32>
    %19 = vector.extract_strided_slice %17 {offsets = [0, 0], sizes = [16, 512], strides = [1, 1]} : vector<17x512xf32> to vector<16x512xf32>
    %20 = tpu.reciprocal %18 {approx = true} : vector<1x512xf32> -> vector<1x512xf32>
    %21 = vector.broadcast %20 : vector<1x512xf32> to vector<16x512xf32>
    %22 = arith.mulf %19, %21 : vector<16x512xf32>
    %c0_13 = arith.constant 0 : index
    %c0_14 = arith.constant 0 : index
    %23 = vector.load %arg6[%c0_13, %c0_14] : memref<32x16xbf16, #tpu.memory_space<vmem>>, vector<32x16xbf16>
    %24 = arith.truncf %22 : vector<16x512xf32> to vector<16x512xbf16>
    %cst_15 = arith.constant dense<0.000000e+00> : vector<32x512xf32>
    %25 = tpu.matmul %23, %24, %cst_15 {dimension_numbers = #tpu.dot_dimension_numbers<[1], [0], [0], [1], [0, 0, 1, 1], [], []>} : vector<32x16xbf16>, vector<16x512xbf16>, vector<32x512xf32> -> vector<32x512xf32>
    %c0_16 = arith.constant 0 : index
    %c0_17 = arith.constant 0 : index
    %26 = memref.load %arg7[%c0_16, %c0_17] : memref<1x1xf32, #tpu.memory_space<smem>>
    %27 = vector.broadcast %26 : f32 to vector<32x512xf32>
    %28 = arith.mulf %27, %25 : vector<32x512xf32>
    %29 = arith.addf %1, %28 : vector<32x512xf32>
    %c0_18 = arith.constant 0 : index
    %c0_19 = arith.constant 0 : index
    %c0_20 = arith.constant 0 : index
    %30 = vector.load %arg8[%c0_18, %c0_19, %c0_20] : memref<1x32x512xf32, #tpu.memory_space<vmem>>, vector<1x32x512xf32>
    %31 = vector.shape_cast %30 : vector<1x32x512xf32> to vector<32x512xf32>
    %32 = vector.shape_cast %29 : vector<32x512xf32> to vector<1x32x512xf32>
    tpu.vector_store %arg8[%c0_18, %c0_19, %c0_20], %32 {strides = array<i32>} : memref<1x32x512xf32, #tpu.memory_space<vmem>>, vector<1x32x512xf32>,
    return
  }
  func.func @transform_0(%arg0: i32, %arg1: i32) -> (i32, i32, i32) {
    %c0_i32 = arith.constant 0 : i32
    %c0_i32_0 = arith.constant 0 : i32
    return %arg0, %c0_i32, %arg1 : i32, i32, i32
  }
  func.func @transform_1(%arg0: i32, %arg1: i32) -> (i32, i32, i32) {
    %c0_i32 = arith.constant 0 : i32
    %c0_i32_0 = arith.constant 0 : i32
    %c0_i32_1 = arith.constant 0 : i32
    return %arg0, %c0_i32, %c0_i32_0 : i32, i32, i32
  }
  func.func @transform_2(%arg0: i32, %arg1: i32) -> (i32, i32, i32) {
    %c0_i32 = arith.constant 0 : i32
    %c0_i32_0 = arith.constant 0 : i32
    %c0_i32_1 = arith.constant 0 : i32
    return %arg0, %c0_i32, %c0_i32_0 : i32, i32, i32
  }
  func.func @transform_3(%arg0: i32, %arg1: i32) -> (i32, i32) {
    %c0_i32 = arith.constant 0 : i32
    %c0_i32_0 = arith.constant 0 : i32
    %c0_i32_1 = arith.constant 0 : i32
    return %c0_i32, %c0_i32_0 : i32, i32
  }
  func.func @transform_4(%arg0: i32, %arg1: i32) -> (i32, i32) {
    %c0_i32 = arith.constant 0 : i32
    %c0_i32_0 = arith.constant 0 : i32
    %c0_i32_1 = arith.constant 0 : i32
    return %c0_i32, %c0_i32_0 : i32, i32
  }
  func.func @transform_5(%arg0: i32, %arg1: i32) -> (i32, i32) {
    %c0_i32 = arith.constant 0 : i32
    %c0_i32_0 = arith.constant 0 : i32
    %c0_i32_1 = arith.constant 0 : i32
    return %c0_i32, %c0_i32_0 : i32, i32
  }
  func.func @transform_6(%arg0: i32, %arg1: i32) -> (i32, i32, i32) {
    %c0_i32 = arith.constant 0 : i32
    %c0_i32_0 = arith.constant 0 : i32
    return %arg0, %c0_i32, %arg1 : i32, i32, i32
  }
}

</mosaic_0001>

<llo_original>
// kernel: tpu_custom_call.1
$region0: #{tpu_custom_call.1}
  #allocation0 [shape = 'u32[]', space=smem, size = 0x4, offset = 0x4, fixed_abs, tag = 'smem constant byte address 0x4 - core index']
  #allocation1 [shape = 'u32[144,128]{1,0:T(1,128)}', space=vmem, size = 0x12000, scoped, tag = 'internal scratch']
  #allocation2 [shape = 'f32[1,1]{1,0:T(1,128)S(6)}', space=smem, size = 0x200, scoped, tag = 'scoped memory for tpu_custom_call.1']
  %s0 = inlined_call_operand.hbm [shape: f32[2,32,1024], index: 0, kind: input, shape index: {}]
  %s1 = inlined_call_operand.vmem [shape: bf16[2,256,4], index: 1, kind: input, shape index: {}]
  %s2 = inlined_call_operand.vmem [shape: bf16[2,17,256], index: 2, kind: input, shape index: {}]
  %s3 = inlined_call_operand.vmem [shape: bf16[4,32], index: 3, kind: input, shape index: {}]
  %s4 = inlined_call_operand.vmem [shape: bf16[32,16], index: 4, kind: input, shape index: {}]
  %s5 = inlined_call_operand.<no memory space> [shape: f32[1,1], index: 5, kind: input, shape index: {}]
  %s6 = inlined_call_operand.hbm [shape: f32[2,32,1024], index: 6, kind: output, shape index: {}]
  %s7 = sld [smem:[#allocation0]]
  $region61: #{tpu_custom_call.1} parent=0
    _
  %s9 = ssub.s32 1, %s7
  %s10 = scalar_select 0, %s9, %s7
  %11 = sst [smem:[#allocation2]] %s5
  $region1: #{tpu_custom_call.1} parent=0
    #allocation3 [shape = 'u8[131072]{0}', space=vmem, size = 0x20000, scoped, tag = 'input window, operand 0']
    #allocation4 [shape = 's32[2]{0}', space=sflag, size = 0x8, scoped, tag = 'scoped memory for tpu_custom_call.1']
    #allocation5 [shape = 's32[2]{0}', space=sflag, size = 0x8, scoped, tag = 'scoped memory for tpu_custom_call.1']
    #allocation6 [shape = 'u8[131072]{0}', space=vmem, size = 0x20000, scoped, tag = 'output window, operand 0']
    %12 = vsyncpa [#allocation4], 0
    %s13 = scalar_lea.sflag [#allocation4], 1
    %14 = vsyncpa %s13, 0
    %15 = vsyncpa [#allocation5], 0
    %s16 = scalar_lea.sflag [#allocation5], 1
    %17 = vsyncpa %s16, 0
    loop: start=0, step=1, limit=6
    $region2: #{tpu_custom_call.1} parent=1 // loop_pre_header
      _
    $region3: #{tpu_custom_call.1} parent=1 // loop_header
      %s19 = sphi 0, %s23
      %p20 = scmp.ge.s32.totalorder %s19, 6
      %s26 = sphi 0, %s38
      %s27 = sphi 0, %s34
      %s28 = sphi 0, %s26
      %s29 = sphi 0, %s27
      %s30 = sphi 0, %s28
      %s31 = sphi 0, %s29
      %s43 = sphi 0, %s45
      %s46 = sphi 0, %s43
      %s47 = sphi 0, %s46
      %s63 = sphi 0, %s47
      %s69 = sphi 0, %s71
      %s72 = sphi 0, %s69
      %s73 = sphi 0, %s72
      %s89 = sphi 0, %s73
      %s95 = sphi 0, %s97
      %s98 = sphi 0, %s95
      %s99 = sphi 0, %s98
      %s115 = sphi 0, %s99
      %s119 = sphi 0, %s119
      %s121 = sphi 0, %s119
      %s122 = sphi 0, %s121
      %s136 = sphi 0, %s122
      %s140 = sphi 0, %s140
      %s142 = sphi 0, %s140
      %s143 = sphi 0, %s142
      %s157 = sphi 0, %s143
      %s161 = sphi 0, %s161
      %s163 = sphi 0, %s161
      %s164 = sphi 0, %s163
      %s178 = sphi 0, %s164
      %s186 = sphi 0, %s188
      %s189 = sphi 0, %s186
      %s190 = sphi 0, %s189
      %s206 = sphi 0, %s190
    $region4: #{tpu_custom_call.1} parent=1 // loop_header_branch
      %22 = sbr.rel (%p20) target = $region8
    $region5: #{tpu_custom_call.1} parent=1 // loop_body
      %s24 = ssub.s32 %s19, 1
      %s25 = ssub.s32 %s19, 2
      %s32 = sadd.s32 1, %s27
      %p33 = scmp.ge.s32.totalorder %s32, 2
      %s34 = scalar_select %p33, 0, %s32
      %s35 = sadd.s32 1, %s26
      %s36 = scalar_select %p33, %s35, %s26
      %p37 = scmp.ge.s32.totalorder %s36, 2
      %s38 = scalar_select %p37, 0, %s36
      %s39 = ssub.s32 %s26, %s38
      %s40 = ssub.s32 %s27, %s34
      %s41 = sor.u32 %s39, %s40
      %p42 = scmp.eq.s32.totalorder %s41, 0
      %s44 = sadd.s32 %s43, 1
      %s45 = scalar_select %p42, %s43, %s44
      %p48 = pneg %p42
      %p49 = scmp.eq.s32.totalorder %s19, 3
      %p50 = por %p48, %p49
      %p51 = scmp.ne.s32.totalorder %s43, %s46
      %p52 = scmp.eq.s32.totalorder %s19, 0
      %p53 = por %p51, %p52
      %p54 = scmp.ne.s32.totalorder %s43, %s46
      %p55 = scmp.eq.s32.totalorder %s24, 3
      %p56 = por %p54, %p55
      %p57 = scmp.ne.s32.totalorder %s46, %s47
      %p58 = scmp.eq.s32.totalorder %s24, 0
      %p59 = por %p57, %p58
      %p60 = scmp.ne.s32.totalorder %s46, %s47
      %p61 = scmp.eq.s32.totalorder %s25, 3
      %p62 = por %p60, %p61
      %p64 = scmp.ne.s32.totalorder %s47, %s63
      %p65 = scmp.eq.s32.totalorder %s25, 0
      %p66 = por %p64, %p65
      %s67 = ssub.s32 %s26, %s38
      %p68 = scmp.eq.s32.totalorder %s67, 0
      %s70 = sadd.s32 %s69, 1
      %s71 = scalar_select %p68, %s69, %s70
      %p74 = pneg %p68
      %p75 = scmp.eq.s32.totalorder %s19, 3
      %p76 = por %p74, %p75
      %p77 = scmp.ne.s32.totalorder %s69, %s72
      %p78 = scmp.eq.s32.totalorder %s19, 0
      %p79 = por %p77, %p78
      %p80 = scmp.ne.s32.totalorder %s69, %s72
      %p81 = scmp.eq.s32.totalorder %s24, 3
      %p82 = por %p80, %p81
      %p83 = scmp.ne.s32.totalorder %s72, %s73
      %p84 = scmp.eq.s32.totalorder %s24, 0
      %p85 = por %p83, %p84
      %p86 = scmp.ne.s32.totalorder %s72, %s73
      %p87 = scmp.eq.s32.totalorder %s25, 3
      %p88 = por %p86, %p87
      %p90 = scmp.ne.s32.totalorder %s73, %s89
      %p91 = scmp.eq.s32.totalorder %s25, 0
      %p92 = por %p90, %p91
      %s93 = ssub.s32 %s26, %s38
      %p94 = scmp.eq.s32.totalorder %s93, 0
      %s96 = sadd.s32 %s95, 1
      %s97 = scalar_select %p94, %s95, %s96
      %p100 = pneg %p94
      %p101 = scmp.eq.s32.totalorder %s19, 3
      %p102 = por %p100, %p101
      %p103 = scmp.ne.s32.totalorder %s95, %s98
      %p104 = scmp.eq.s32.totalorder %s19, 0
      %p105 = por %p103, %p104
      %p106 = scmp.ne.s32.totalorder %s95, %s98
      %p107 = scmp.eq.s32.totalorder %s24, 3
      %p108 = por %p106, %p107
      %p109 = scmp.ne.s32.totalorder %s98, %s99
      %p110 = scmp.eq.s32.totalorder %s24, 0
      %p111 = por %p109, %p110
      %p112 = scmp.ne.s32.totalorder %s98, %s99
      %p113 = scmp.eq.s32.totalorder %s25, 3
      %p114 = por %p112, %p113
      %p116 = scmp.ne.s32.totalorder %s99, %s115
      %p117 = scmp.eq.s32.totalorder %s25, 0
      %p118 = por %p116, %p117
      %s120 = sadd.s32 %s119, 1
      %p123 = scmp.eq.s32.totalorder %s19, 3
      %p124 = scmp.ne.s32.totalorder %s119, %s121
      %p125 = scmp.eq.s32.totalorder %s19, 0
      %p126 = por %p124, %p125
      %p127 = scmp.ne.s32.totalorder %s119, %s121
      %p128 = scmp.eq.s32.totalorder %s24, 3
      %p129 = por %p127, %p128
      %p130 = scmp.ne.s32.totalorder %s121, %s122
      %p131 = scmp.eq.s32.totalorder %s24, 0
      %p132 = por %p130, %p131
      %p133 = scmp.ne.s32.totalorder %s121, %s122
      %p134 = scmp.eq.s32.totalorder %s25, 3
      %p135 = por %p133, %p134
      %p137 = scmp.ne.s32.totalorder %s122, %s136
      %p138 = scmp.eq.s32.totalorder %s25, 0
      %p139 = por %p137, %p138
      %s141 = sadd.s32 %s140, 1
      %p144 = scmp.eq.s32.totalorder %s19, 3
      %p145 = scmp.ne.s32.totalorder %s140, %s142
      %p146 = scmp.eq.s32.totalorder %s19, 0
      %p147 = por %p145, %p146
      %p148 = scmp.ne.s32.totalorder %s140, %s142
      %p149 = scmp.eq.s32.totalorder %s24, 3
      %p150 = por %p148, %p149
      %p151 = scmp.ne.s32.totalorder %s142, %s143
      %p152 = scmp.eq.s32.totalorder %s24, 0
      %p153 = por %p151, %p152
      %p154 = scmp.ne.s32.totalorder %s142, %s143
      %p155 = scmp.eq.s32.totalorder %s25, 3
      %p156 = por %p154, %p155
      %p158 = scmp.ne.s32.totalorder %s143, %s157
      %p159 = scmp.eq.s32.totalorder %s25, 0
      %p160 = por %p158, %p159
      %s162 = sadd.s32 %s161, 1
      %p165 = scmp.eq.s32.totalorder %s19, 3
      %p166 = scmp.ne.s32.totalorder %s161, %s163
      %p167 = scmp.eq.s32.totalorder %s19, 0
      %p168 = por %p166, %p167
      %p169 = scmp.ne.s32.totalorder %s161, %s163
      %p170 = scmp.eq.s32.totalorder %s24, 3
      %p171 = por %p169, %p170
      %p172 = scmp.ne.s32.totalorder %s163, %s164
      %p173 = scmp.eq.s32.totalorder %s24, 0
      %p174 = por %p172, %p173
      %p175 = scmp.ne.s32.totalorder %s163, %s164
      %p176 = scmp.eq.s32.totalorder %s25, 3
      %p177 = por %p175, %p176
      %p179 = scmp.ne.s32.totalorder %s164, %s178
      %p180 = scmp.eq.s32.totalorder %s25, 0
      %p181 = por %p179, %p180
      %s182 = ssub.s32 %s26, %s38
      %s183 = ssub.s32 %s27, %s34
      %s184 = sor.u32 %s182, %s183
      %p185 = scmp.eq.s32.totalorder %s184, 0
      %s187 = sadd.s32 %s186, 1
      %s188 = scalar_select %p185, %s186, %s187
      %p191 = pneg %p185
      %p192 = scmp.eq.s32.totalorder %s19, 3
      %p193 = por %p191, %p192
      %p194 = scmp.ne.s32.totalorder %s186, %s189
      %p195 = scmp.eq.s32.totalorder %s19, 0
      %p196 = por %p194, %p195
      %p197 = scmp.ne.s32.totalorder %s186, %s189
      %p198 = scmp.eq.s32.totalorder %s24, 3
      %p199 = por %p197, %p198
      %p200 = scmp.ne.s32.totalorder %s189, %s190
      %p201 = scmp.eq.s32.totalorder %s24, 0
      %p202 = por %p200, %p201
      %p203 = scmp.ne.s32.totalorder %s189, %s190
      %p204 = scmp.eq.s32.totalorder %s25, 3
      %p205 = por %p203, %p204
      %p207 = scmp.ne.s32.totalorder %s190, %s206
      %p208 = scmp.eq.s32.totalorder %s25, 0
      %p209 = por %p207, %p208
      %p210 = scmp.le.s32.totalorder 1, %s19
      %p211 = scmp.lt.s32.totalorder %s19, 5
      %p212 = pnand %p210, %p211
      %p213 = pneg %p212
      // Predicated region
      $region9: #{tpu_custom_call.1} parent=5 // pred_check
        _
      $region10: #{tpu_custom_call.1} parent=5 // pred_check_branch
        %215 = sbr.rel (%p212) target = $region12
      $region11: #{tpu_custom_call.1} parent=5 // pred_region
        %s216 = ssub.s32 %s19, 1
        // Predicated region
        $region13: #{tpu_custom_call.1} parent=11 // pred_check
          %p217 = pneg %p132
        $region14: #{tpu_custom_call.1} parent=11 // pred_check_branch
          %219 = sbr.rel (%p217) target = $region16
        $region15: #{tpu_custom_call.1} parent=11 // pred_region
          _
        $region16: #{tpu_custom_call.1} parent=11 // pred_fallthru
          _
        // Predicated region
        $region17: #{tpu_custom_call.1} parent=11 // pred_check
          %p220 = pneg %p153
        $region18: #{tpu_custom_call.1} parent=11 // pred_check_branch
          %222 = sbr.rel (%p220) target = $region20
        $region19: #{tpu_custom_call.1} parent=11 // pred_region
          _
        $region20: #{tpu_custom_call.1} parent=11 // pred_fallthru
          _
        // Predicated region
        $region21: #{tpu_custom_call.1} parent=11 // pred_check
          %p223 = pneg %p174
        $region22: #{tpu_custom_call.1} parent=11 // pred_check_branch
          %225 = sbr.rel (%p223) target = $region24
        $region23: #{tpu_custom_call.1} parent=11 // pred_region
          _
        $region24: #{tpu_custom_call.1} parent=11 // pred_fallthru
          _
      $region12: #{tpu_custom_call.1} parent=5 // pred_fallthru
        _
      %p226 = scmp.lt.s32.totalorder %s19, 4
      // Predicated region
      $region25: #{tpu_custom_call.1} parent=5 // pred_check
        %p227 = pneg %p226
      $region26: #{tpu_custom_call.1} parent=5 // pred_check_branch
        %229 = sbr.rel (%p227) target = $region28
      $region27: #{tpu_custom_call.1} parent=5 // pred_region
        // Predicated region
        $region29: #{tpu_custom_call.1} parent=27 // pred_check
          %p230 = pneg %p53
        $region30: #{tpu_custom_call.1} parent=27 // pred_check_branch
          %232 = sbr.rel (%p230) target = $region32
        $region31: #{tpu_custom_call.1} parent=27 // pred_region
          %s233 = sand.u32 %s43, 1
          %s234 = scalar_lea.sflag [#allocation4], %s233
          %s235 = sand.u32 %s43, 1
          %s236 = smul.addr %s235, 128
          %s237 = scalar_lea.vmem [#allocation3], %s236
          %s238 = smul.u32 4, %s27
          %s240 = ssub.s32 2048, 2048
          %241 = vsyncadd %s234, %s240
          %s242 = smul.addr %s26, 32
          %s243 = sadd.s32 %s238, %s242
          %s244 = smul.addr %s243, 128
          %s245 = scalar_lea.hbm %s0, %s244
          %s246 = sshll.u32 %s237, 4
          %s247 = int_to_ptr.vmem [resolvable:$true] %s246
          %252 = dma.hbm_to_vmem [thread:$0]  %s245, 2048, %s247, %s234, 1024, 512, 32
        $region32: #{tpu_custom_call.1} parent=27 // pred_fallthru
          _
        // Predicated region
        $region33: #{tpu_custom_call.1} parent=27 // pred_check
          %p253 = pneg %p79
        $region34: #{tpu_custom_call.1} parent=27 // pred_check_branch
          %255 = sbr.rel (%p253) target = $region36
        $region35: #{tpu_custom_call.1} parent=27 // pred_region
          %p256 = scmp.lt.s32.totalorder %s26, 1
          %s257 = scalar_select %p256, %s26, 1
          %s258 = smul.addr %s257, 32
          %s259 = smul.addr %s258, 4
          %s260 = scalar_lea.vmem %s1, %s259
        $region36: #{tpu_custom_call.1} parent=27 // pred_fallthru
          _
        // Predicated region
        $region37: #{tpu_custom_call.1} parent=27 // pred_check
          %p261 = pneg %p105
        $region38: #{tpu_custom_call.1} parent=27 // pred_check_branch
          %263 = sbr.rel (%p261) target = $region40
        $region39: #{tpu_custom_call.1} parent=27 // pred_region
          %p264 = scmp.lt.s32.totalorder %s26, 1
          %s265 = scalar_select %p264, %s26, 1
          %s266 = smul.addr %s265, 6
          %s267 = smul.addr %s266, 4
          %s268 = scalar_lea.vmem %s2, %s267
        $region40: #{tpu_custom_call.1} parent=27 // pred_fallthru
          _
      $region28: #{tpu_custom_call.1} parent=5 // pred_fallthru
        _
      %p269 = scmp.le.s32.totalorder 1, %s19
      %p270 = scmp.lt.s32.totalorder %s19, 5
      %p271 = pnand %p269, %p270
      %p272 = pneg %p271
      // Predicated region
      $region41: #{tpu_custom_call.1} parent=5 // pred_check
        _
      $region42: #{tpu_custom_call.1} parent=5 // pred_check_branch
        %274 = sbr.rel (%p271) target = $region44
      $region43: #{tpu_custom_call.1} parent=5 // pred_region
        %s275 = ssub.s32 %s19, 1
        %s276 = sand.u32 %s46, 1
        %s277 = scalar_lea.sflag [#allocation4], %s276
        %s278 = sand.u32 %s46, 1
        %s279 = smul.addr %s278, 128
        %s280 = scalar_lea.vmem [#allocation3], %s279
        // Predicated region
        $region45: #{tpu_custom_call.1} parent=43 // pred_check
          %p281 = pneg %p59
        $region46: #{tpu_custom_call.1} parent=43 // pred_check_branch
          %283 = sbr.rel (%p281) target = $region48
        $region47: #{tpu_custom_call.1} parent=43 // pred_region
          %284 = dma.done %s277, 2048
        $region48: #{tpu_custom_call.1} parent=43 // pred_fallthru
          _
        %s285 = sand.u32 %s46, 1
        %s286 = scalar_lea.sflag [#allocation4], %s285
        %s287 = sand.u32 %s46, 1
        %s288 = smul.addr %s287, 128
        %s289 = scalar_lea.vmem [#allocation3], %s288
        %p290 = pneg %p59
        %p291 = pneg %p56
        %p292 = scmp.lt.s32.totalorder %s28, 1
        %s293 = scalar_select %p292, %s28, 1
        %s294 = smul.addr %s293, 32
        %s295 = smul.addr %s294, 4
        %s296 = scalar_lea.vmem %s1, %s295
        %p297 = pneg %p85
        %p298 = pneg %p82
        %p299 = scmp.lt.s32.totalorder %s28, 1
        %s300 = scalar_select %p299, %s28, 1
        %s301 = smul.addr %s300, 6
        %s302 = smul.addr %s301, 4
        %s303 = scalar_lea.vmem %s2, %s302
        %p304 = pneg %p111
        %p305 = pneg %p108
        %p306 = pneg %p132
        %p307 = pneg %p129
        %p308 = pneg %p153
        %p309 = pneg %p150
        %p310 = pneg %p174
        %p311 = pneg %p171
        %p312 = pneg %p202
        %p313 = pneg %p199
        %s314 = sand.u32 %s189, 1
        %s315 = scalar_lea.sflag [#allocation5], %s314
        %s316 = sand.u32 %s189, 1
        %s317 = smul.addr %s316, 128
        %s318 = scalar_lea.vmem [#allocation6], %s317
        %s319 = smul.u32 4, %s29
        %p320 = scmp.lt.s32.totalorder %s28, 1
        %s321 = scalar_select %p320, %s28, 1
        %s322 = smul.addr %s321, 32
        %s323 = smul.addr %s322, 4
        %s324 = scalar_lea.vmem %s1, %s323
        %p325 = scmp.lt.s32.totalorder %s28, 1
        %s326 = scalar_select %p325, %s28, 1
        %s327 = smul.addr %s326, 6
        %s328 = smul.addr %s327, 4
        %s329 = scalar_lea.vmem %s2, %s328
        %s330 = smul.u32 4, %s29
        %v332 = vld [vmem:[%s280] sm:$0xff]
        %v333 = vld [vmem:[%s280 + $0x8] sm:$0xff]
        %v334 = vld [vmem:[%s280 + $0x10] sm:$0xff]
        %v335 = vld [vmem:[%s280 + $0x18] sm:$0xff]
        %v336 = vld [vmem:[%s280 + $0x20] sm:$0xff]
        %v337 = vld [vmem:[%s280 + $0x28] sm:$0xff]
        %v338 = vld [vmem:[%s280 + $0x30] sm:$0xff]
        %v339 = vld [vmem:[%s280 + $0x38] sm:$0xff]
        %v340 = vld [vmem:[%s280 + $0x40] sm:$0xff]
        %v341 = vld [vmem:[%s280 + $0x48] sm:$0xff]
        %v342 = vld [vmem:[%s280 + $0x50] sm:$0xff]
        %v343 = vld [vmem:[%s280 + $0x58] sm:$0xff]
        %v344 = vld [vmem:[%s280 + $0x60] sm:$0xff]
        %v345 = vld [vmem:[%s280 + $0x68] sm:$0xff]
        %v346 = vld [vmem:[%s280 + $0x70] sm:$0xff]
        %v347 = vld [vmem:[%s280 + $0x78] sm:$0xff]
        %v348 = vpack.c.bf16 %v336, %v332
        %v349 = vpack.c.bf16 %v337, %v333
        %v350 = vpack.c.bf16 %v338, %v334
        %v351 = vpack.c.bf16 %v339, %v335
        %v352 = vpack.c.bf16 %v344, %v340
        %v353 = vpack.c.bf16 %v345, %v341
        %v354 = vpack.c.bf16 %v346, %v342
        %v355 = vpack.c.bf16 %v347, %v343
        %v356 = vld [vmem:[%s3] sm:$0x3]
        %vm357 = vcmask 261120
        %v359 = vsel %vm357, %v356, 0
        %361 = vmatprep.subr.bf16.mxu0 %v349
        %362 = vmatpush1.bf16.msra.mxu0 %v348
        %363 = vmatprep.subr.bf16.mxu0 %v353
        %364 = vmatpush1.bf16.msra.mxu0 %v352
        %365 = vmatprep.subr.bf16.mxu0 0
        %366 = vmatpush1.bf16.msra.mxu0 0
        %367 = vmatprep.subr.bf16.mxu0 0
        %368 = vmatpush1.bf16.msra.mxu0 0
        %369 = vmatprep.subr.bf16.mxu0 0
        %370 = vmatpush1.bf16.msra.mxu0 0
        %371 = vmatprep.subr.bf16.mxu0 0
        %372 = vmatpush1.bf16.msra.mxu0 0
        %373 = vmatprep.subr.bf16.mxu0 0
        %374 = vmatpush1.bf16.msra.mxu0 0
        %375 = vmatprep.subr.bf16.mxu0 0
        %376 = vmatpush1.bf16.msra.mxu0 0
        %377 = vmatprep.subr.bf16.mxu0 0
        %378 = vmatpush1.bf16.msra.mxu0 0
        %379 = vmatprep.subr.bf16.mxu0 0
        %380 = vmatpush1.bf16.msra.mxu0 0
        %381 = vmatprep.subr.bf16.mxu0 0
        %382 = vmatpush1.bf16.msra.mxu0 0
        %383 = vmatprep.subr.bf16.mxu0 0
        %384 = vmatpush1.bf16.msra.mxu0 0
        %385 = vmatprep.subr.bf16.mxu0 0
        %386 = vmatpush1.bf16.msra.mxu0 0
        %387 = vmatprep.subr.bf16.mxu0 0
        %388 = vmatpush1.bf16.msra.mxu0 0
        %389 = vmatprep.subr.bf16.mxu0 0
        %390 = vmatpush1.bf16.msra.mxu0 0
        %391 = vmatprep.subr.bf16.mxu0 0
        %392 = vmatpush1.bf16.msra.mxu0 0
        %393 = vmatprep.mubr.bf16.mxu0 0
        %394 = vmatmul.mubr.bf16.gmra.mrb[0].mxu0 %v359
        %v395 = vpop.f32.mrb[0].mxu0
        %v396 = vadd.f32 0.0, %v395
        %v397 = vpop.f32.mrb[0].mxu0
        %v398 = vadd.f32 0.0, %v397
        %v399 = vpop.f32.mrb[0].mxu0
        %v400 = vpop.f32.mrb[0].mxu0
        %401 = vdwg.mxu0
        %402 = vmatprep.subr.bf16.mxu0 %v351
        %403 = vmatpush1.bf16.msra.mxu0 %v350
        %404 = vmatprep.subr.bf16.mxu0 %v355
        %405 = vmatpush1.bf16.msra.mxu0 %v354
        %406 = vmatprep.subr.bf16.mxu0 0
        %407 = vmatpush1.bf16.msra.mxu0 0
        %408 = vmatprep.subr.bf16.mxu0 0
        %409 = vmatpush1.bf16.msra.mxu0 0
        %410 = vmatprep.subr.bf16.mxu0 0
        %411 = vmatpush1.bf16.msra.mxu0 0
        %412 = vmatprep.subr.bf16.mxu0 0
        %413 = vmatpush1.bf16.msra.mxu0 0
        %414 = vmatprep.subr.bf16.mxu0 0
        %415 = vmatpush1.bf16.msra.mxu0 0
        %416 = vmatprep.subr.bf16.mxu0 0
        %417 = vmatpush1.bf16.msra.mxu0 0
        %418 = vmatprep.subr.bf16.mxu0 0
        %419 = vmatpush1.bf16.msra.mxu0 0
        %420 = vmatprep.subr.bf16.mxu0 0
        %421 = vmatpush1.bf16.msra.mxu0 0
        %422 = vmatprep.subr.bf16.mxu0 0
        %423 = vmatpush1.bf16.msra.mxu0 0
        %424 = vmatprep.subr.bf16.mxu0 0
        %425 = vmatpush1.bf16.msra.mxu0 0
        %426 = vmatprep.subr.bf16.mxu0 0
        %427 = vmatpush1.bf16.msra.mxu0 0
        %428 = vmatprep.subr.bf16.mxu0 0
        %429 = vmatpush1.bf16.msra.mxu0 0
        %430 = vmatprep.subr.bf16.mxu0 0
        %431 = vmatpush1.bf16.msra.mxu0 0
        %432 = vmatprep.subr.bf16.mxu0 0
        %433 = vmatpush1.bf16.msra.mxu0 0
        %434 = vmatprep.mubr.bf16.mxu0 0
        %435 = vmatmul.mubr.bf16.gmra.mrb[0].mxu0 %v359
        %v436 = vpop.f32.mrb[0].mxu0
        %v437 = vadd.f32 0.0, %v436
        %v438 = vpop.f32.mrb[0].mxu0
        %v439 = vadd.f32 0.0, %v438
        %v440 = vpop.f32.mrb[0].mxu0
        %v441 = vpop.f32.mrb[0].mxu0
        %442 = vdwg.mxu0
        %v443 = vld [vmem:[%s324] sm:$0xf]
        %v444 = vld [vmem:[%s324 + $0x4] sm:$0xf]
        %v445 = vld [vmem:[%s324 + $0x8] sm:$0xf]
        %v446 = vld [vmem:[%s324 + $0xc] sm:$0xf]
        %v447 = vld [vmem:[%s324 + $0x10] sm:$0xf]
        %v448 = vld [vmem:[%s324 + $0x14] sm:$0xf]
        %v449 = vld [vmem:[%s324 + $0x18] sm:$0xf]
        %v450 = vld [vmem:[%s324 + $0x1c] sm:$0xf]
        %v451 = vld [vmem:[%s324 + $0x20] sm:$0xf]
        %v452 = vld [vmem:[%s324 + $0x24] sm:$0xf]
        %v453 = vld [vmem:[%s324 + $0x28] sm:$0xf]
        %v454 = vld [vmem:[%s324 + $0x2c] sm:$0xf]
        %v455 = vld [vmem:[%s324 + $0x30] sm:$0xf]
        %v456 = vld [vmem:[%s324 + $0x34] sm:$0xf]
        %v457 = vld [vmem:[%s324 + $0x38] sm:$0xf]
        %v458 = vld [vmem:[%s324 + $0x3c] sm:$0xf]
        %v459 = vld [vmem:[%s324 + $0x40] sm:$0xf]
        %v460 = vld [vmem:[%s324 + $0x44] sm:$0xf]
        %v461 = vld [vmem:[%s324 + $0x48] sm:$0xf]
        %v462 = vld [vmem:[%s324 + $0x4c] sm:$0xf]
        %v463 = vld [vmem:[%s324 + $0x50] sm:$0xf]
        %v464 = vld [vmem:[%s324 + $0x54] sm:$0xf]
        %v465 = vld [vmem:[%s324 + $0x58] sm:$0xf]
        %v466 = vld [vmem:[%s324 + $0x5c] sm:$0xf]
        %v467 = vld [vmem:[%s324 + $0x60] sm:$0xf]
        %v468 = vld [vmem:[%s324 + $0x64] sm:$0xf]
        %v469 = vld [vmem:[%s324 + $0x68] sm:$0xf]
        %v470 = vld [vmem:[%s324 + $0x6c] sm:$0xf]
        %v471 = vld [vmem:[%s324 + $0x70] sm:$0xf]
        %v472 = vld [vmem:[%s324 + $0x74] sm:$0xf]
        %v473 = vld [vmem:[%s324 + $0x78] sm:$0xf]
        %v474 = vld [vmem:[%s324 + $0x7c] sm:$0xf]
        %v475 = vpack.c.bf16 %v396, %v396
        %v476 = vpack.c.bf16 %v398, %v398
        %v477 = vpack.c.bf16 %v437, %v437
        %v478 = vpack.c.bf16 %v439, %v439
        %v511 = vunpack.c.l.b16 %v443
        %v512 = vunpack.c.l.b16 %v444
        %v513 = vunpack.c.l.b16 %v445
        %v514 = vunpack.c.l.b16 %v446
        %v515 = vunpack.c.l.b16 %v447
        %v516 = vunpack.c.l.b16 %v448
        %v517 = vunpack.c.l.b16 %v449
        %v518 = vunpack.c.l.b16 %v450
        %v519 = vunpack.c.l.b16 %v451
        %v520 = vunpack.c.l.b16 %v452
        %v521 = vunpack.c.l.b16 %v453
        %v522 = vunpack.c.l.b16 %v454
        %v523 = vunpack.c.l.b16 %v455
        %v524 = vunpack.c.l.b16 %v456
        %v525 = vunpack.c.l.b16 %v457
        %v526 = vunpack.c.l.b16 %v458
        %v527 = vunpack.c.l.b16 %v459
        %v528 = vunpack.c.l.b16 %v460
        %v529 = vunpack.c.l.b16 %v461
        %v530 = vunpack.c.l.b16 %v462
        %v531 = vunpack.c.l.b16 %v463
        %v532 = vunpack.c.l.b16 %v464
        %v533 = vunpack.c.l.b16 %v465
        %v534 = vunpack.c.l.b16 %v466
        %v535 = vunpack.c.l.b16 %v467
        %v536 = vunpack.c.l.b16 %v468
        %v537 = vunpack.c.l.b16 %v469
        %v538 = vunpack.c.l.b16 %v470
        %v539 = vunpack.c.l.b16 %v471
        %v540 = vunpack.c.l.b16 %v472
        %v541 = vunpack.c.l.b16 %v473
        %v542 = vunpack.c.l.b16 %v474
        %v543 = vpack.c.b16 %v512, %v511
        %v544 = vpack.c.b16 %v514, %v513
        %v545 = vpack.c.b16 %v516, %v515
        %v546 = vpack.c.b16 %v518, %v517
        %v547 = vpack.c.b16 %v520, %v519
        %v548 = vpack.c.b16 %v522, %v521
        %v549 = vpack.c.b16 %v524, %v523
        %v550 = vpack.c.b16 %v526, %v525
        %v551 = vpack.c.b16 %v528, %v527
        %v552 = vpack.c.b16 %v530, %v529
        %v553 = vpack.c.b16 %v532, %v531
        %v554 = vpack.c.b16 %v534, %v533
        %v555 = vpack.c.b16 %v536, %v535
        %v556 = vpack.c.b16 %v538, %v537
        %v557 = vpack.c.b16 %v540, %v539
        %v558 = vpack.c.b16 %v542, %v541
        %vm559 = vcmask 31744
        %v561 = vsel %vm559, %v543, 0
        %v564 = vsel %vm559, %v544, 0
        %v567 = vsel %vm559, %v545, 0
        %v570 = vsel %vm559, %v546, 0
        %v573 = vsel %vm559, %v547, 0
        %v576 = vsel %vm559, %v548, 0
        %v579 = vsel %vm559, %v549, 0
        %v582 = vsel %vm559, %v550, 0
        %v585 = vsel %vm559, %v551, 0
        %v588 = vsel %vm559, %v552, 0
        %v591 = vsel %vm559, %v553, 0
        %v594 = vsel %vm559, %v554, 0
        %v597 = vsel %vm559, %v555, 0
        %v600 = vsel %vm559, %v556, 0
        %v603 = vsel %vm559, %v557, 0
        %v606 = vsel %vm559, %v558, 0
        %vm608 = vcmask 1041408
        %v610 = vsel %vm608, %v475, 0
        %v613 = vsel %vm608, %v476, 0
        %v616 = vsel %vm608, %v477, 0
        %v619 = vsel %vm608, %v478, 0
        %621 = vmatprep.subr.bf16.mxu0 %v613
        %622 = vmatpush1.bf16.msra.mxu0 %v610
        %623 = vmatprep.subr.bf16.mxu0 0
        %624 = vmatpush1.bf16.msra.mxu0 0
        %625 = vmatprep.subr.bf16.mxu0 0
        %626 = vmatpush1.bf16.msra.mxu0 0
        %627 = vmatprep.subr.bf16.mxu0 0
        %628 = vmatpush1.bf16.msra.mxu0 0
        %629 = vmatprep.subr.bf16.mxu0 0
        %630 = vmatpush1.bf16.msra.mxu0 0
        %631 = vmatprep.subr.bf16.mxu0 0
        %632 = vmatpush1.bf16.msra.mxu0 0
        %633 = vmatprep.subr.bf16.mxu0 0
        %634 = vmatpush1.bf16.msra.mxu0 0
        %635 = vmatprep.subr.bf16.mxu0 0
        %636 = vmatpush1.bf16.msra.mxu0 0
        %637 = vmatprep.subr.bf16.mxu0 0
        %638 = vmatpush1.bf16.msra.mxu0 0
        %639 = vmatprep.subr.bf16.mxu0 0
        %640 = vmatpush1.bf16.msra.mxu0 0
        %641 = vmatprep.subr.bf16.mxu0 0
        %642 = vmatpush1.bf16.msra.mxu0 0
        %643 = vmatprep.subr.bf16.mxu0 0
        %644 = vmatpush1.bf16.msra.mxu0 0
        %645 = vmatprep.subr.bf16.mxu0 0
        %646 = vmatpush1.bf16.msra.mxu0 0
        %647 = vmatprep.subr.bf16.mxu0 0
        %648 = vmatpush1.bf16.msra.mxu0 0
        %649 = vmatprep.subr.bf16.mxu0 0
        %650 = vmatpush1.bf16.msra.mxu0 0
        %651 = vmatprep.subr.bf16.mxu0 0
        %652 = vmatpush1.bf16.msra.mxu0 0
        %653 = vmatprep.mubr.bf16.mxu0 0
        %654 = vmatmul.mubr.bf16.gmra.mrb[0].mxu0 %v561
        %v655 = vpop.f32.mrb[0].mxu0
        %v656 = vadd.f32 0.0, %v655
        %v657 = vpop.f32.mrb[0].mxu0
        %v658 = vadd.f32 0.0, %v657
        %v659 = vpop.f32.mrb[0].mxu0
        %v660 = vadd.f32 0.0, %v659
        %v661 = vpop.f32.mrb[0].mxu0
        %v662 = vadd.f32 0.0, %v661
        %663 = vmatprep.mubr.bf16.mxu0 0
        %664 = vmatmul.mubr.bf16.gmra.mrb[0].mxu0 %v564
        %v665 = vpop.f32.mrb[0].mxu0
        %v666 = vadd.f32 0.0, %v665
        %v667 = vpop.f32.mrb[0].mxu0
        %v668 = vadd.f32 0.0, %v667
        %v669 = vpop.f32.mrb[0].mxu0
        %v670 = vadd.f32 0.0, %v669
        %v671 = vpop.f32.mrb[0].mxu0
        %v672 = vadd.f32 0.0, %v671
        %673 = vmatprep.mubr.bf16.mxu0 0
        %674 = vmatmul.mubr.bf16.gmra.mrb[0].mxu0 %v567
        %v675 = vpop.f32.mrb[0].mxu0
        %v676 = vadd.f32 0.0, %v675
        %v677 = vpop.f32.mrb[0].mxu0
        %v678 = vadd.f32 0.0, %v677
        %v679 = vpop.f32.mrb[0].mxu0
        %v680 = vadd.f32 0.0, %v679
        %v681 = vpop.f32.mrb[0].mxu0
        %v682 = vadd.f32 0.0, %v681
        %683 = vmatprep.mubr.bf16.mxu0 0
        %684 = vmatmul.mubr.bf16.gmra.mrb[0].mxu0 %v570
        %v685 = vpop.f32.mrb[0].mxu0
        %v686 = vadd.f32 0.0, %v685
        %v687 = vpop.f32.mrb[0].mxu0
        %v688 = vadd.f32 0.0, %v687
        %v689 = vpop.f32.mrb[0].mxu0
        %v690 = vadd.f32 0.0, %v689
        %v691 = vpop.f32.mrb[0].mxu0
        %v692 = vadd.f32 0.0, %v691
        %693 = vmatprep.mubr.bf16.mxu0 0
        %694 = vmatmul.mubr.bf16.gmra.mrb[0].mxu0 %v573
        %v695 = vpop.f32.mrb[0].mxu0
        %v696 = vadd.f32 0.0, %v695
        %v697 = vpop.f32.mrb[0].mxu0
        %v698 = vadd.f32 0.0, %v697
        %v699 = vpop.f32.mrb[0].mxu0
        %v700 = vadd.f32 0.0, %v699
        %v701 = vpop.f32.mrb[0].mxu0
        %v702 = vadd.f32 0.0, %v701
        %703 = vmatprep.mubr.bf16.mxu0 0
        %704 = vmatmul.mubr.bf16.gmra.mrb[0].mxu0 %v576
        %v705 = vpop.f32.mrb[0].mxu0
        %v706 = vadd.f32 0.0, %v705
        %v707 = vpop.f32.mrb[0].mxu0
        %v708 = vadd.f32 0.0, %v707
        %v709 = vpop.f32.mrb[0].mxu0
        %v710 = vadd.f32 0.0, %v709
        %v711 = vpop.f32.mrb[0].mxu0
        %v712 = vadd.f32 0.0, %v711
        %713 = vmatprep.mubr.bf16.mxu0 0
        %714 = vmatmul.mubr.bf16.gmra.mrb[0].mxu0 %v579
        %v715 = vpop.f32.mrb[0].mxu0
        %v716 = vadd.f32 0.0, %v715
        %v717 = vpop.f32.mrb[0].mxu0
        %v718 = vadd.f32 0.0, %v717
        %v719 = vpop.f32.mrb[0].mxu0
        %v720 = vadd.f32 0.0, %v719
        %v721 = vpop.f32.mrb[0].mxu0
        %v722 = vadd.f32 0.0, %v721
        %723 = vmatprep.mubr.bf16.mxu0 0
        %724 = vmatmul.mubr.bf16.gmra.mrb[0].mxu0 %v582
        %v725 = vpop.f32.mrb[0].mxu0
        %v726 = vadd.f32 0.0, %v725
        %v727 = vpop.f32.mrb[0].mxu0
        %v728 = vadd.f32 0.0, %v727
        %v729 = vpop.f32.mrb[0].mxu0
        %v730 = vadd.f32 0.0, %v729
        %v731 = vpop.f32.mrb[0].mxu0
        %v732 = vadd.f32 0.0, %v731
        %733 = vmatprep.mubr.bf16.mxu0 0
        %734 = vmatmul.mubr.bf16.gmra.mrb[0].mxu0 %v585
        %v735 = vpop.f32.mrb[0].mxu0
        %v736 = vadd.f32 0.0, %v735
        %v737 = vpop.f32.mrb[0].mxu0
        %v738 = vadd.f32 0.0, %v737
        %v739 = vpop.f32.mrb[0].mxu0
        %v740 = vadd.f32 0.0, %v739
        %v741 = vpop.f32.mrb[0].mxu0
        %v742 = vadd.f32 0.0, %v741
        %743 = vmatprep.mubr.bf16.mxu0 0
        %744 = vmatmul.mubr.bf16.gmra.mrb[0].mxu0 %v588
        %v745 = vpop.f32.mrb[0].mxu0
        %v746 = vadd.f32 0.0, %v745
        %v747 = vpop.f32.mrb[0].mxu0
        %v748 = vadd.f32 0.0, %v747
        %v749 = vpop.f32.mrb[0].mxu0
        %v750 = vadd.f32 0.0, %v749
        %v751 = vpop.f32.mrb[0].mxu0
        %v752 = vadd.f32 0.0, %v751
        %753 = vmatprep.mubr.bf16.mxu0 0
        %754 = vmatmul.mubr.bf16.gmra.mrb[0].mxu0 %v591
        %v755 = vpop.f32.mrb[0].mxu0
        %v756 = vadd.f32 0.0, %v755
        %v757 = vpop.f32.mrb[0].mxu0
        %v758 = vadd.f32 0.0, %v757
        %v759 = vpop.f32.mrb[0].mxu0
        %v760 = vadd.f32 0.0, %v759
        %v761 = vpop.f32.mrb[0].mxu0
        %v762 = vadd.f32 0.0, %v761
        %763 = vmatprep.mubr.bf16.mxu0 0
        %764 = vmatmul.mubr.bf16.gmra.mrb[0].mxu0 %v594
        %v765 = vpop.f32.mrb[0].mxu0
        %v766 = vadd.f32 0.0, %v765
        %v767 = vpop.f32.mrb[0].mxu0
        %v768 = vadd.f32 0.0, %v767
        %v769 = vpop.f32.mrb[0].mxu0
        %v770 = vadd.f32 0.0, %v769
        %v771 = vpop.f32.mrb[0].mxu0
        %v772 = vadd.f32 0.0, %v771
        %773 = vmatprep.mubr.bf16.mxu0 0
        %774 = vmatmul.mubr.bf16.gmra.mrb[0].mxu0 %v597
        %v775 = vpop.f32.mrb[0].mxu0
        %v776 = vadd.f32 0.0, %v775
        %v777 = vpop.f32.mrb[0].mxu0
        %v778 = vadd.f32 0.0, %v777
        %v779 = vpop.f32.mrb[0].mxu0
        %v780 = vadd.f32 0.0, %v779
        %v781 = vpop.f32.mrb[0].mxu0
        %v782 = vadd.f32 0.0, %v781
        %783 = vmatprep.mubr.bf16.mxu0 0
        %784 = vmatmul.mubr.bf16.gmra.mrb[0].mxu0 %v600
        %v785 = vpop.f32.mrb[0].mxu0
        %v786 = vadd.f32 0.0, %v785
        %v787 = vpop.f32.mrb[0].mxu0
        %v788 = vadd.f32 0.0, %v787
        %v789 = vpop.f32.mrb[0].mxu0
        %v790 = vadd.f32 0.0, %v789
        %v791 = vpop.f32.mrb[0].mxu0
        %v792 = vadd.f32 0.0, %v791
        %793 = vmatprep.mubr.bf16.mxu0 0
        %794 = vmatmul.mubr.bf16.gmra.mrb[0].mxu0 %v603
        %v795 = vpop.f32.mrb[0].mxu0
        %v796 = vadd.f32 0.0, %v795
        %v797 = vpop.f32.mrb[0].mxu0
        %v798 = vadd.f32 0.0, %v797
        %v799 = vpop.f32.mrb[0].mxu0
        %v800 = vadd.f32 0.0, %v799
        %v801 = vpop.f32.mrb[0].mxu0
        %v802 = vadd.f32 0.0, %v801
        %803 = vmatprep.mubr.bf16.mxu0 0
        %804 = vmatmul.mubr.bf16.gmra.mrb[0].mxu0 %v606
        %v805 = vpop.f32.mrb[0].mxu0
        %v806 = vadd.f32 0.0, %v805
        %v807 = vpop.f32.mrb[0].mxu0
        %v808 = vadd.f32 0.0, %v807
        %v809 = vpop.f32.mrb[0].mxu0
        %v810 = vadd.f32 0.0, %v809
        %v811 = vpop.f32.mrb[0].mxu0
        %v812 = vadd.f32 0.0, %v811
        %813 = vdwg.mxu0
        %814 = vmatprep.subr.bf16.mxu0 %v619
        %815 = vmatpush1.bf16.msra.mxu0 %v616
        %816 = vmatprep.subr.bf16.mxu0 0
        %817 = vmatpush1.bf16.msra.mxu0 0
        %818 = vmatprep.subr.bf16.mxu0 0
        %819 = vmatpush1.bf16.msra.mxu0 0
        %820 = vmatprep.subr.bf16.mxu0 0
        %821 = vmatpush1.bf16.msra.mxu0 0
        %822 = vmatprep.subr.bf16.mxu0 0
        %823 = vmatpush1.bf16.msra.mxu0 0
        %824 = vmatprep.subr.bf16.mxu0 0
        %825 = vmatpush1.bf16.msra.mxu0 0
        %826 = vmatprep.subr.bf16.mxu0 0
        %827 = vmatpush1.bf16.msra.mxu0 0
        %828 = vmatprep.subr.bf16.mxu0 0
        %829 = vmatpush1.bf16.msra.mxu0 0
        %830 = vmatprep.subr.bf16.mxu0 0
        %831 = vmatpush1.bf16.msra.mxu0 0
        %832 = vmatprep.subr.bf16.mxu0 0
        %833 = vmatpush1.bf16.msra.mxu0 0
        %834 = vmatprep.subr.bf16.mxu0 0
        %835 = vmatpush1.bf16.msra.mxu0 0
        %836 = vmatprep.subr.bf16.mxu0 0
        %837 = vmatpush1.bf16.msra.mxu0 0
        %838 = vmatprep.subr.bf16.mxu0 0
        %839 = vmatpush1.bf16.msra.mxu0 0
        %840 = vmatprep.subr.bf16.mxu0 0
        %841 = vmatpush1.bf16.msra.mxu0 0
        %842 = vmatprep.subr.bf16.mxu0 0
        %843 = vmatpush1.bf16.msra.mxu0 0
        %844 = vmatprep.subr.bf16.mxu0 0
        %845 = vmatpush1.bf16.msra.mxu0 0
        %846 = vmatprep.mubr.bf16.mxu0 0
        %847 = vmatmul.mubr.bf16.gmra.mrb[0].mxu0 %v561
        %v848 = vpop.f32.mrb[0].mxu0
        %v849 = vadd.f32 0.0, %v848
        %v850 = vpop.f32.mrb[0].mxu0
        %v851 = vadd.f32 0.0, %v850
        %v852 = vpop.f32.mrb[0].mxu0
        %v853 = vadd.f32 0.0, %v852
        %v854 = vpop.f32.mrb[0].mxu0
        %v855 = vadd.f32 0.0, %v854
        %856 = vmatprep.mubr.bf16.mxu0 0
        %857 = vmatmul.mubr.bf16.gmra.mrb[0].mxu0 %v564
        %v858 = vpop.f32.mrb[0].mxu0
        %v859 = vadd.f32 0.0, %v858
        %v860 = vpop.f32.mrb[0].mxu0
        %v861 = vadd.f32 0.0, %v860
        %v862 = vpop.f32.mrb[0].mxu0
        %v863 = vadd.f32 0.0, %v862
        %v864 = vpop.f32.mrb[0].mxu0
        %v865 = vadd.f32 0.0, %v864
        %866 = vmatprep.mubr.bf16.mxu0 0
        %867 = vmatmul.mubr.bf16.gmra.mrb[0].mxu0 %v567
        %v868 = vpop.f32.mrb[0].mxu0
        %v869 = vadd.f32 0.0, %v868
        %v870 = vpop.f32.mrb[0].mxu0
        %v871 = vadd.f32 0.0, %v870
        %v872 = vpop.f32.mrb[0].mxu0
        %v873 = vadd.f32 0.0, %v872
        %v874 = vpop.f32.mrb[0].mxu0
        %v875 = vadd.f32 0.0, %v874
        %876 = vmatprep.mubr.bf16.mxu0 0
        %877 = vmatmul.mubr.bf16.gmra.mrb[0].mxu0 %v570
        %v878 = vpop.f32.mrb[0].mxu0
        %v879 = vadd.f32 0.0, %v878
        %v880 = vpop.f32.mrb[0].mxu0
        %v881 = vadd.f32 0.0, %v880
        %v882 = vpop.f32.mrb[0].mxu0
        %v883 = vadd.f32 0.0, %v882
        %v884 = vpop.f32.mrb[0].mxu0
        %v885 = vadd.f32 0.0, %v884
        %886 = vmatprep.mubr.bf16.mxu0 0
        %887 = vmatmul.mubr.bf16.gmra.mrb[0].mxu0 %v573
        %v888 = vpop.f32.mrb[0].mxu0
        %v889 = vadd.f32 0.0, %v888
        %v890 = vpop.f32.mrb[0].mxu0
        %v891 = vadd.f32 0.0, %v890
        %v892 = vpop.f32.mrb[0].mxu0
        %v893 = vadd.f32 0.0, %v892
        %v894 = vpop.f32.mrb[0].mxu0
        %v895 = vadd.f32 0.0, %v894
        %896 = vmatprep.mubr.bf16.mxu0 0
        %897 = vmatmul.mubr.bf16.gmra.mrb[0].mxu0 %v576
        %v898 = vpop.f32.mrb[0].mxu0
        %v899 = vadd.f32 0.0, %v898
        %v900 = vpop.f32.mrb[0].mxu0
        %v901 = vadd.f32 0.0, %v900
        %v902 = vpop.f32.mrb[0].mxu0
        %v903 = vadd.f32 0.0, %v902
        %v904 = vpop.f32.mrb[0].mxu0
        %v905 = vadd.f32 0.0, %v904
        %906 = vmatprep.mubr.bf16.mxu0 0
        %907 = vmatmul.mubr.bf16.gmra.mrb[0].mxu0 %v579
        %v908 = vpop.f32.mrb[0].mxu0
        %v909 = vadd.f32 0.0, %v908
        %v910 = vpop.f32.mrb[0].mxu0
        %v911 = vadd.f32 0.0, %v910
        %v912 = vpop.f32.mrb[0].mxu0
        %v913 = vadd.f32 0.0, %v912
        %v914 = vpop.f32.mrb[0].mxu0
        %v915 = vadd.f32 0.0, %v914
        %916 = vmatprep.mubr.bf16.mxu0 0
        %917 = vmatmul.mubr.bf16.gmra.mrb[0].mxu0 %v582
        %v918 = vpop.f32.mrb[0].mxu0
        %v919 = vadd.f32 0.0, %v918
        %v920 = vpop.f32.mrb[0].mxu0
        %v921 = vadd.f32 0.0, %v920
        %v922 = vpop.f32.mrb[0].mxu0
        %v923 = vadd.f32 0.0, %v922
        %v924 = vpop.f32.mrb[0].mxu0
        %v925 = vadd.f32 0.0, %v924
        %926 = vmatprep.mubr.bf16.mxu0 0
        %927 = vmatmul.mubr.bf16.gmra.mrb[0].mxu0 %v585
        %v928 = vpop.f32.mrb[0].mxu0
        %v929 = vadd.f32 0.0, %v928
        %v930 = vpop.f32.mrb[0].mxu0
        %v931 = vadd.f32 0.0, %v930
        %v932 = vpop.f32.mrb[0].mxu0
        %v933 = vadd.f32 0.0, %v932
        %v934 = vpop.f32.mrb[0].mxu0
        %v935 = vadd.f32 0.0, %v934
        %936 = vmatprep.mubr.bf16.mxu0 0
        %937 = vmatmul.mubr.bf16.gmra.mrb[0].mxu0 %v588
        %v938 = vpop.f32.mrb[0].mxu0
        %v939 = vadd.f32 0.0, %v938
        %v940 = vpop.f32.mrb[0].mxu0
        %v941 = vadd.f32 0.0, %v940
        %v942 = vpop.f32.mrb[0].mxu0
        %v943 = vadd.f32 0.0, %v942
        %v944 = vpop.f32.mrb[0].mxu0
        %v945 = vadd.f32 0.0, %v944
        %946 = vmatprep.mubr.bf16.mxu0 0
        %947 = vmatmul.mubr.bf16.gmra.mrb[0].mxu0 %v591
        %v948 = vpop.f32.mrb[0].mxu0
        %v949 = vadd.f32 0.0, %v948
        %v950 = vpop.f32.mrb[0].mxu0
        %v951 = vadd.f32 0.0, %v950
        %v952 = vpop.f32.mrb[0].mxu0
        %v953 = vadd.f32 0.0, %v952
        %v954 = vpop.f32.mrb[0].mxu0
        %v955 = vadd.f32 0.0, %v954
        %956 = vmatprep.mubr.bf16.mxu0 0
        %957 = vmatmul.mubr.bf16.gmra.mrb[0].mxu0 %v594
        %v958 = vpop.f32.mrb[0].mxu0
        %v959 = vadd.f32 0.0, %v958
        %v960 = vpop.f32.mrb[0].mxu0
        %v961 = vadd.f32 0.0, %v960
        %v962 = vpop.f32.mrb[0].mxu0
        %v963 = vadd.f32 0.0, %v962
        %v964 = vpop.f32.mrb[0].mxu0
        %v965 = vadd.f32 0.0, %v964
        %966 = vmatprep.mubr.bf16.mxu0 0
        %967 = vmatmul.mubr.bf16.gmra.mrb[0].mxu0 %v597
        %v968 = vpop.f32.mrb[0].mxu0
        %v969 = vadd.f32 0.0, %v968
        %v970 = vpop.f32.mrb[0].mxu0
        %v971 = vadd.f32 0.0, %v970
        %v972 = vpop.f32.mrb[0].mxu0
        %v973 = vadd.f32 0.0, %v972
        %v974 = vpop.f32.mrb[0].mxu0
        %v975 = vadd.f32 0.0, %v974
        %976 = vmatprep.mubr.bf16.mxu0 0
        %977 = vmatmul.mubr.bf16.gmra.mrb[0].mxu0 %v600
        %v978 = vpop.f32.mrb[0].mxu0
        %v979 = vadd.f32 0.0, %v978
        %v980 = vpop.f32.mrb[0].mxu0
        %v981 = vadd.f32 0.0, %v980
        %v982 = vpop.f32.mrb[0].mxu0
        %v983 = vadd.f32 0.0, %v982
        %v984 = vpop.f32.mrb[0].mxu0
        %v985 = vadd.f32 0.0, %v984
        %986 = vmatprep.mubr.bf16.mxu0 0
        %987 = vmatmul.mubr.bf16.gmra.mrb[0].mxu0 %v603
        %v988 = vpop.f32.mrb[0].mxu0
        %v989 = vadd.f32 0.0, %v988
        %v990 = vpop.f32.mrb[0].mxu0
        %v991 = vadd.f32 0.0, %v990
        %v992 = vpop.f32.mrb[0].mxu0
        %v993 = vadd.f32 0.0, %v992
        %v994 = vpop.f32.mrb[0].mxu0
        %v995 = vadd.f32 0.0, %v994
        %996 = vmatprep.mubr.bf16.mxu0 0
        %997 = vmatmul.mubr.bf16.gmra.mrb[0].mxu0 %v606
        %v998 = vpop.f32.mrb[0].mxu0
        %v999 = vadd.f32 0.0, %v998
        %v1000 = vpop.f32.mrb[0].mxu0
        %v1001 = vadd.f32 0.0, %v1000
        %v1002 = vpop.f32.mrb[0].mxu0
        %v1003 = vadd.f32 0.0, %v1002
        %v1004 = vpop.f32.mrb[0].mxu0
        %v1005 = vadd.f32 0.0, %v1004
        %1006 = vdwg.mxu0
        %v1007 = vmax.f32 %v656, %v660
        %v1008 = vmax.f32 %v1007, %v666
        %v1009 = vmax.f32 %v1008, %v670
        %v1010 = vmax.f32 %v1009, %v676
        %v1011 = vmax.f32 %v1010, %v680
        %v1012 = vmax.f32 %v1011, %v686
        %v1013 = vmax.f32 %v1012, %v690
        %v1014 = vmax.f32 %v1013, %v696
        %v1015 = vmax.f32 %v1014, %v700
        %v1016 = vmax.f32 %v1015, %v706
        %v1017 = vmax.f32 %v1016, %v710
        %v1018 = vmax.f32 %v1017, %v716
        %v1019 = vmax.f32 %v1018, %v720
        %v1020 = vmax.f32 %v1019, %v726
        %v1021 = vmax.f32 %v1020, %v730
        %v1022 = vmax.f32 %v1021, %v736
        %v1023 = vmax.f32 %v1022, %v740
        %v1024 = vmax.f32 %v1023, %v746
        %v1025 = vmax.f32 %v1024, %v750
        %v1026 = vmax.f32 %v1025, %v756
        %v1027 = vmax.f32 %v1026, %v760
        %v1028 = vmax.f32 %v1027, %v766
        %v1029 = vmax.f32 %v1028, %v770
        %v1030 = vmax.f32 %v1029, %v776
        %v1031 = vmax.f32 %v1030, %v780
        %v1032 = vmax.f32 %v1031, %v786
        %v1033 = vmax.f32 %v1032, %v790
        %v1034 = vmax.f32 %v1033, %v796
        %v1035 = vmax.f32 %v1034, %v800
        %v1036 = vmax.f32 %v1035, %v806
        %v1037 = vmax.f32 %v1036, %v810
        %v1038 = vrot.slane %v1037, 4
        %v1039 = vmax.f32 %v1037, %v1038
        %v1040 = vrot.slane %v1039, 2
        %v1041 = vmax.f32 %v1039, %v1040
        %v1042 = vrot.slane %v1041, 1
        %v1043 = vmax.f32 %v1041, %v1042
        %v1044 = vmax.f32 %v658, %v662
        %v1045 = vmax.f32 %v1044, %v668
        %v1046 = vmax.f32 %v1045, %v672
        %v1047 = vmax.f32 %v1046, %v678
        %v1048 = vmax.f32 %v1047, %v682
        %v1049 = vmax.f32 %v1048, %v688
        %v1050 = vmax.f32 %v1049, %v692
        %v1051 = vmax.f32 %v1050, %v698
        %v1052 = vmax.f32 %v1051, %v702
        %v1053 = vmax.f32 %v1052, %v708
        %v1054 = vmax.f32 %v1053, %v712
        %v1055 = vmax.f32 %v1054, %v718
        %v1056 = vmax.f32 %v1055, %v722
        %v1057 = vmax.f32 %v1056, %v728
        %v1058 = vmax.f32 %v1057, %v732
        %v1059 = vmax.f32 %v1058, %v738
        %v1060 = vmax.f32 %v1059, %v742
        %v1061 = vmax.f32 %v1060, %v748
        %v1062 = vmax.f32 %v1061, %v752
        %v1063 = vmax.f32 %v1062, %v758
        %v1064 = vmax.f32 %v1063, %v762
        %v1065 = vmax.f32 %v1064, %v768
        %v1066 = vmax.f32 %v1065, %v772
        %v1067 = vmax.f32 %v1066, %v778
        %v1068 = vmax.f32 %v1067, %v782
        %v1069 = vmax.f32 %v1068, %v788
        %v1070 = vmax.f32 %v1069, %v792
        %v1071 = vmax.f32 %v1070, %v798
        %v1072 = vmax.f32 %v1071, %v802
        %v1073 = vmax.f32 %v1072, %v808
        %v1074 = vmax.f32 %v1073, %v812
        %v1075 = vrot.slane %v1074, 4
        %v1076 = vmax.f32 %v1074, %v1075
        %v1077 = vrot.slane %v1076, 2
        %v1078 = vmax.f32 %v1076, %v1077
        %v1079 = vrot.slane %v1078, 1
        %v1080 = vmax.f32 %v1078, %v1079
        %v1081 = vmax.f32 %v849, %v853
        %v1082 = vmax.f32 %v1081, %v859
        %v1083 = vmax.f32 %v1082, %v863
        %v1084 = vmax.f32 %v1083, %v869
        %v1085 = vmax.f32 %v1084, %v873
        %v1086 = vmax.f32 %v1085, %v879
        %v1087 = vmax.f32 %v1086, %v883
        %v1088 = vmax.f32 %v1087, %v889
        %v1089 = vmax.f32 %v1088, %v893
        %v1090 = vmax.f32 %v1089, %v899
        %v1091 = vmax.f32 %v1090, %v903
        %v1092 = vmax.f32 %v1091, %v909
        %v1093 = vmax.f32 %v1092, %v913
        %v1094 = vmax.f32 %v1093, %v919
        %v1095 = vmax.f32 %v1094, %v923
        %v1096 = vmax.f32 %v1095, %v929
        %v1097 = vmax.f32 %v1096, %v933
        %v1098 = vmax.f32 %v1097, %v939
        %v1099 = vmax.f32 %v1098, %v943
        %v1100 = vmax.f32 %v1099, %v949
        %v1101 = vmax.f32 %v1100, %v953
        %v1102 = vmax.f32 %v1101, %v959
        %v1103 = vmax.f32 %v1102, %v963
        %v1104 = vmax.f32 %v1103, %v969
        %v1105 = vmax.f32 %v1104, %v973
        %v1106 = vmax.f32 %v1105, %v979
        %v1107 = vmax.f32 %v1106, %v983
        %v1108 = vmax.f32 %v1107, %v989
        %v1109 = vmax.f32 %v1108, %v993
        %v1110 = vmax.f32 %v1109, %v999
        %v1111 = vmax.f32 %v1110, %v1003
        %v1112 = vrot.slane %v1111, 4
        %v1113 = vmax.f32 %v1111, %v1112
        %v1114 = vrot.slane %v1113, 2
        %v1115 = vmax.f32 %v1113, %v1114
        %v1116 = vrot.slane %v1115, 1
        %v1117 = vmax.f32 %v1115, %v1116
        %v1118 = vmax.f32 %v851, %v855
        %v1119 = vmax.f32 %v1118, %v861
        %v1120 = vmax.f32 %v1119, %v865
        %v1121 = vmax.f32 %v1120, %v871
        %v1122 = vmax.f32 %v1121, %v875
        %v1123 = vmax.f32 %v1122, %v881
        %v1124 = vmax.f32 %v1123, %v885
        %v1125 = vmax.f32 %v1124, %v891
        %v1126 = vmax.f32 %v1125, %v895
        %v1127 = vmax.f32 %v1126, %v901
        %v1128 = vmax.f32 %v1127, %v905
        %v1129 = vmax.f32 %v1128, %v911
        %v1130 = vmax.f32 %v1129, %v915
        %v1131 = vmax.f32 %v1130, %v921
        %v1132 = vmax.f32 %v1131, %v925
        %v1133 = vmax.f32 %v1132, %v931
        %v1134 = vmax.f32 %v1133, %v935
        %v1135 = vmax.f32 %v1134, %v941
        %v1136 = vmax.f32 %v1135, %v945
        %v1137 = vmax.f32 %v1136, %v951
        %v1138 = vmax.f32 %v1137, %v955
        %v1139 = vmax.f32 %v1138, %v961
        %v1140 = vmax.f32 %v1139, %v965
        %v1141 = vmax.f32 %v1140, %v971
        %v1142 = vmax.f32 %v1141, %v975
        %v1143 = vmax.f32 %v1142, %v981
        %v1144 = vmax.f32 %v1143, %v985
        %v1145 = vmax.f32 %v1144, %v991
        %v1146 = vmax.f32 %v1145, %v995
        %v1147 = vmax.f32 %v1146, %v1001
        %v1148 = vmax.f32 %v1147, %v1005
        %v1149 = vrot.slane %v1148, 4
        %v1150 = vmax.f32 %v1148, %v1149
        %v1151 = vrot.slane %v1150, 2
        %v1152 = vmax.f32 %v1150, %v1151
        %v1153 = vrot.slane %v1152, 1
        %v1154 = vmax.f32 %v1152, %v1153
        %v1155 = vsub.f32 %v656, %v1043
        %v1156 = vsub.f32 %v658, %v1080
        %v1157 = vsub.f32 %v849, %v1117
        %v1158 = vsub.f32 %v851, %v1154
        %v1159 = vsub.f32 %v660, %v1043
        %v1160 = vsub.f32 %v662, %v1080
        %v1161 = vsub.f32 %v853, %v1117
        %v1162 = vsub.f32 %v855, %v1154
        %v1163 = vsub.f32 %v666, %v1043
        %v1164 = vsub.f32 %v668, %v1080
        %v1165 = vsub.f32 %v859, %v1117
        %v1166 = vsub.f32 %v861, %v1154
        %v1167 = vsub.f32 %v670, %v1043
        %v1168 = vsub.f32 %v672, %v1080
        %v1169 = vsub.f32 %v863, %v1117
        %v1170 = vsub.f32 %v865, %v1154
        %v1171 = vsub.f32 %v676, %v1043
        %v1172 = vsub.f32 %v678, %v1080
        %v1173 = vsub.f32 %v869, %v1117
        %v1174 = vsub.f32 %v871, %v1154
        %v1175 = vsub.f32 %v680, %v1043
        %v1176 = vsub.f32 %v682, %v1080
        %v1177 = vsub.f32 %v873, %v1117
        %v1178 = vsub.f32 %v875, %v1154
        %v1179 = vsub.f32 %v686, %v1043
        %v1180 = vsub.f32 %v688, %v1080
        %v1181 = vsub.f32 %v879, %v1117
        %v1182 = vsub.f32 %v881, %v1154
        %v1183 = vsub.f32 %v690, %v1043
        %v1184 = vsub.f32 %v692, %v1080
        %v1185 = vsub.f32 %v883, %v1117
        %v1186 = vsub.f32 %v885, %v1154
        %v1187 = vsub.f32 %v696, %v1043
        %v1188 = vsub.f32 %v698, %v1080
        %v1189 = vsub.f32 %v889, %v1117
        %v1190 = vsub.f32 %v891, %v1154
        %v1191 = vsub.f32 %v700, %v1043
        %v1192 = vsub.f32 %v702, %v1080
        %v1193 = vsub.f32 %v893, %v1117
        %v1194 = vsub.f32 %v895, %v1154
        %v1195 = vsub.f32 %v706, %v1043
        %v1196 = vsub.f32 %v708, %v1080
        %v1197 = vsub.f32 %v899, %v1117
        %v1198 = vsub.f32 %v901, %v1154
        %v1199 = vsub.f32 %v710, %v1043
        %v1200 = vsub.f32 %v712, %v1080
        %v1201 = vsub.f32 %v903, %v1117
        %v1202 = vsub.f32 %v905, %v1154
        %v1203 = vsub.f32 %v716, %v1043
        %v1204 = vsub.f32 %v718, %v1080
        %v1205 = vsub.f32 %v909, %v1117
        %v1206 = vsub.f32 %v911, %v1154
        %v1207 = vsub.f32 %v720, %v1043
        %v1208 = vsub.f32 %v722, %v1080
        %v1209 = vsub.f32 %v913, %v1117
        %v1210 = vsub.f32 %v915, %v1154
        %v1211 = vsub.f32 %v726, %v1043
        %v1212 = vsub.f32 %v728, %v1080
        %v1213 = vsub.f32 %v919, %v1117
        %v1214 = vsub.f32 %v921, %v1154
        %v1215 = vsub.f32 %v730, %v1043
        %v1216 = vsub.f32 %v732, %v1080
        %v1217 = vsub.f32 %v923, %v1117
        %v1218 = vsub.f32 %v925, %v1154
        %v1219 = vsub.f32 %v736, %v1043
        %v1220 = vsub.f32 %v738, %v1080
        %v1221 = vsub.f32 %v929, %v1117
        %v1222 = vsub.f32 %v931, %v1154
        %v1223 = vsub.f32 %v740, %v1043
        %v1224 = vsub.f32 %v742, %v1080
        %v1225 = vsub.f32 %v933, %v1117
        %v1226 = vsub.f32 %v935, %v1154
        %v1227 = vsub.f32 %v746, %v1043
        %v1228 = vsub.f32 %v748, %v1080
        %v1229 = vsub.f32 %v939, %v1117
        %v1230 = vsub.f32 %v941, %v1154
        %v1231 = vsub.f32 %v750, %v1043
        %v1232 = vsub.f32 %v752, %v1080
        %v1233 = vsub.f32 %v943, %v1117
        %v1234 = vsub.f32 %v945, %v1154
        %v1235 = vsub.f32 %v756, %v1043
        %v1236 = vsub.f32 %v758, %v1080
        %v1237 = vsub.f32 %v949, %v1117
        %v1238 = vsub.f32 %v951, %v1154
        %v1239 = vsub.f32 %v760, %v1043
        %v1240 = vsub.f32 %v762, %v1080
        %v1241 = vsub.f32 %v953, %v1117
        %v1242 = vsub.f32 %v955, %v1154
        %v1243 = vsub.f32 %v766, %v1043
        %v1244 = vsub.f32 %v768, %v1080
        %v1245 = vsub.f32 %v959, %v1117
        %v1246 = vsub.f32 %v961, %v1154
        %v1247 = vsub.f32 %v770, %v1043
        %v1248 = vsub.f32 %v772, %v1080
        %v1249 = vsub.f32 %v963, %v1117
        %v1250 = vsub.f32 %v965, %v1154
        %v1251 = vsub.f32 %v776, %v1043
        %v1252 = vsub.f32 %v778, %v1080
        %v1253 = vsub.f32 %v969, %v1117
        %v1254 = vsub.f32 %v971, %v1154
        %v1255 = vsub.f32 %v780, %v1043
        %v1256 = vsub.f32 %v782, %v1080
        %v1257 = vsub.f32 %v973, %v1117
        %v1258 = vsub.f32 %v975, %v1154
        %v1259 = vsub.f32 %v786, %v1043
        %v1260 = vsub.f32 %v788, %v1080
        %v1261 = vsub.f32 %v979, %v1117
        %v1262 = vsub.f32 %v981, %v1154
        %v1263 = vsub.f32 %v790, %v1043
        %v1264 = vsub.f32 %v792, %v1080
        %v1265 = vsub.f32 %v983, %v1117
        %v1266 = vsub.f32 %v985, %v1154
        %v1267 = vsub.f32 %v796, %v1043
        %v1268 = vsub.f32 %v798, %v1080
        %v1269 = vsub.f32 %v989, %v1117
        %v1270 = vsub.f32 %v991, %v1154
        %v1271 = vsub.f32 %v800, %v1043
        %v1272 = vsub.f32 %v802, %v1080
        %v1273 = vsub.f32 %v993, %v1117
        %v1274 = vsub.f32 %v995, %v1154
        %v1275 = vsub.f32 %v806, %v1043
        %v1276 = vsub.f32 %v808, %v1080
        %v1277 = vsub.f32 %v999, %v1117
        %v1278 = vsub.f32 %v1001, %v1154
        %v1279 = vsub.f32 %v810, %v1043
        %v1280 = vsub.f32 %v812, %v1080
        %v1281 = vsub.f32 %v1003, %v1117
        %v1282 = vsub.f32 %v1005, %v1154
        %v1283 = vmul.f32 %v1155, 1.442695
        %v1284 = vpow.pop %v1283
        %v1285 = vmul.f32 %v1156, 1.442695
        %v1286 = vpow.pop %v1285
        %v1287 = vmul.f32 %v1157, 1.442695
        %v1288 = vpow.pop %v1287
        %v1289 = vmul.f32 %v1158, 1.442695
        %v1290 = vpow.pop %v1289
        %v1291 = vmul.f32 %v1159, 1.442695
        %v1292 = vpow.pop %v1291
        %v1293 = vmul.f32 %v1160, 1.442695
        %v1294 = vpow.pop %v1293
        %v1295 = vmul.f32 %v1161, 1.442695
        %v1296 = vpow.pop %v1295
        %v1297 = vmul.f32 %v1162, 1.442695
        %v1298 = vpow.pop %v1297
        %v1299 = vmul.f32 %v1163, 1.442695
        %v1300 = vpow.pop %v1299
        %v1301 = vmul.f32 %v1164, 1.442695
        %v1302 = vpow.pop %v1301
        %v1303 = vmul.f32 %v1165, 1.442695
        %v1304 = vpow.pop %v1303
        %v1305 = vmul.f32 %v1166, 1.442695
        %v1306 = vpow.pop %v1305
        %v1307 = vmul.f32 %v1167, 1.442695
        %v1308 = vpow.pop %v1307
        %v1309 = vmul.f32 %v1168, 1.442695
        %v1310 = vpow.pop %v1309
        %v1311 = vmul.f32 %v1169, 1.442695
        %v1312 = vpow.pop %v1311
        %v1313 = vmul.f32 %v1170, 1.442695
        %v1314 = vpow.pop %v1313
        %v1315 = vmul.f32 %v1171, 1.442695
        %v1316 = vpow.pop %v1315
        %v1317 = vmul.f32 %v1172, 1.442695
        %v1318 = vpow.pop %v1317
        %v1319 = vmul.f32 %v1173, 1.442695
        %v1320 = vpow.pop %v1319
        %v1321 = vmul.f32 %v1174, 1.442695
        %v1322 = vpow.pop %v1321
        %v1323 = vmul.f32 %v1175, 1.442695
        %v1324 = vpow.pop %v1323
        %v1325 = vmul.f32 %v1176, 1.442695
        %v1326 = vpow.pop %v1325
        %v1327 = vmul.f32 %v1177, 1.442695
        %v1328 = vpow.pop %v1327
        %v1329 = vmul.f32 %v1178, 1.442695
        %v1330 = vpow.pop %v1329
        %v1331 = vmul.f32 %v1179, 1.442695
        %v1332 = vpow.pop %v1331
        %v1333 = vmul.f32 %v1180, 1.442695
        %v1334 = vpow.pop %v1333
        %v1335 = vmul.f32 %v1181, 1.442695
        %v1336 = vpow.pop %v1335
        %v1337 = vmul.f32 %v1182, 1.442695
        %v1338 = vpow.pop %v1337
        %v1339 = vmul.f32 %v1183, 1.442695
        %v1340 = vpow.pop %v1339
        %v1341 = vmul.f32 %v1184, 1.442695
        %v1342 = vpow.pop %v1341
        %v1343 = vmul.f32 %v1185, 1.442695
        %v1344 = vpow.pop %v1343
        %v1345 = vmul.f32 %v1186, 1.442695
        %v1346 = vpow.pop %v1345
        %v1347 = vmul.f32 %v1187, 1.442695
        %v1348 = vpow.pop %v1347
        %v1349 = vmul.f32 %v1188, 1.442695
        %v1350 = vpow.pop %v1349
        %v1351 = vmul.f32 %v1189, 1.442695
        %v1352 = vpow.pop %v1351
        %v1353 = vmul.f32 %v1190, 1.442695
        %v1354 = vpow.pop %v1353
        %v1355 = vmul.f32 %v1191, 1.442695
        %v1356 = vpow.pop %v1355
        %v1357 = vmul.f32 %v1192, 1.442695
        %v1358 = vpow.pop %v1357
        %v1359 = vmul.f32 %v1193, 1.442695
        %v1360 = vpow.pop %v1359
        %v1361 = vmul.f32 %v1194, 1.442695
        %v1362 = vpow.pop %v1361
        %v1363 = vmul.f32 %v1195, 1.442695
        %v1364 = vpow.pop %v1363
        %v1365 = vmul.f32 %v1196, 1.442695
        %v1366 = vpow.pop %v1365
        %v1367 = vmul.f32 %v1197, 1.442695
        %v1368 = vpow.pop %v1367
        %v1369 = vmul.f32 %v1198, 1.442695
        %v1370 = vpow.pop %v1369
        %v1371 = vmul.f32 %v1199, 1.442695
        %v1372 = vpow.pop %v1371
        %v1373 = vmul.f32 %v1200, 1.442695
        %v1374 = vpow.pop %v1373
        %v1375 = vmul.f32 %v1201, 1.442695
        %v1376 = vpow.pop %v1375
        %v1377 = vmul.f32 %v1202, 1.442695
        %v1378 = vpow.pop %v1377
        %v1379 = vmul.f32 %v1203, 1.442695
        %v1380 = vpow.pop %v1379
        %v1381 = vmul.f32 %v1204, 1.442695
        %v1382 = vpow.pop %v1381
        %v1383 = vmul.f32 %v1205, 1.442695
        %v1384 = vpow.pop %v1383
        %v1385 = vmul.f32 %v1206, 1.442695
        %v1386 = vpow.pop %v1385
        %v1387 = vmul.f32 %v1207, 1.442695
        %v1388 = vpow.pop %v1387
        %v1389 = vmul.f32 %v1208, 1.442695
        %v1390 = vpow.pop %v1389
        %v1391 = vmul.f32 %v1209, 1.442695
        %v1392 = vpow.pop %v1391
        %v1393 = vmul.f32 %v1210, 1.442695
        %v1394 = vpow.pop %v1393
        %v1395 = vmul.f32 %v1211, 1.442695
        %v1396 = vpow.pop %v1395
        %v1397 = vmul.f32 %v1212, 1.442695
        %v1398 = vpow.pop %v1397
        %v1399 = vmul.f32 %v1213, 1.442695
        %v1400 = vpow.pop %v1399
        %v1401 = vmul.f32 %v1214, 1.442695
        %v1402 = vpow.pop %v1401
        %v1403 = vmul.f32 %v1215, 1.442695
        %v1404 = vpow.pop %v1403
        %v1405 = vmul.f32 %v1216, 1.442695
        %v1406 = vpow.pop %v1405
        %v1407 = vmul.f32 %v1217, 1.442695
        %v1408 = vpow.pop %v1407
        %v1409 = vmul.f32 %v1218, 1.442695
        %v1410 = vpow.pop %v1409
        %v1411 = vmul.f32 %v1219, 1.442695
        %v1412 = vpow.pop %v1411
        %v1413 = vmul.f32 %v1220, 1.442695
        %v1414 = vpow.pop %v1413
        %v1415 = vmul.f32 %v1221, 1.442695
        %v1416 = vpow.pop %v1415
        %v1417 = vmul.f32 %v1222, 1.442695
        %v1418 = vpow.pop %v1417
        %v1419 = vmul.f32 %v1223, 1.442695
        %v1420 = vpow.pop %v1419
        %v1421 = vmul.f32 %v1224, 1.442695
        %v1422 = vpow.pop %v1421
        %v1423 = vmul.f32 %v1225, 1.442695
        %v1424 = vpow.pop %v1423
        %v1425 = vmul.f32 %v1226, 1.442695
        %v1426 = vpow.pop %v1425
        %v1427 = vmul.f32 %v1227, 1.442695
        %v1428 = vpow.pop %v1427
        %v1429 = vmul.f32 %v1228, 1.442695
        %v1430 = vpow.pop %v1429
        %v1431 = vmul.f32 %v1229, 1.442695
        %v1432 = vpow.pop %v1431
        %v1433 = vmul.f32 %v1230, 1.442695
        %v1434 = vpow.pop %v1433
        %v1435 = vmul.f32 %v1231, 1.442695
        %v1436 = vpow.pop %v1435
        %v1437 = vmul.f32 %v1232, 1.442695
        %v1438 = vpow.pop %v1437
        %v1439 = vmul.f32 %v1233, 1.442695
        %v1440 = vpow.pop %v1439
        %v1441 = vmul.f32 %v1234, 1.442695
        %v1442 = vpow.pop %v1441
        %v1443 = vmul.f32 %v1235, 1.442695
        %v1444 = vpow.pop %v1443
        %v1445 = vmul.f32 %v1236, 1.442695
        %v1446 = vpow.pop %v1445
        %v1447 = vmul.f32 %v1237, 1.442695
        %v1448 = vpow.pop %v1447
        %v1449 = vmul.f32 %v1238, 1.442695
        %v1450 = vpow.pop %v1449
        %v1451 = vmul.f32 %v1239, 1.442695
        %v1452 = vpow.pop %v1451
        %v1453 = vmul.f32 %v1240, 1.442695
        %v1454 = vpow.pop %v1453
        %v1455 = vmul.f32 %v1241, 1.442695
        %v1456 = vpow.pop %v1455
        %v1457 = vmul.f32 %v1242, 1.442695
        %v1458 = vpow.pop %v1457
        %v1459 = vmul.f32 %v1243, 1.442695
        %v1460 = vpow.pop %v1459
        %v1461 = vmul.f32 %v1244, 1.442695
        %v1462 = vpow.pop %v1461
        %v1463 = vmul.f32 %v1245, 1.442695
        %v1464 = vpow.pop %v1463
        %v1465 = vmul.f32 %v1246, 1.442695
        %v1466 = vpow.pop %v1465
        %v1467 = vmul.f32 %v1247, 1.442695
        %v1468 = vpow.pop %v1467
        %v1469 = vmul.f32 %v1248, 1.442695
        %v1470 = vpow.pop %v1469
        %v1471 = vmul.f32 %v1249, 1.442695
        %v1472 = vpow.pop %v1471
        %v1473 = vmul.f32 %v1250, 1.442695
        %v1474 = vpow.pop %v1473
        %v1475 = vmul.f32 %v1251, 1.442695
        %v1476 = vpow.pop %v1475
        %v1477 = vmul.f32 %v1252, 1.442695
        %v1478 = vpow.pop %v1477
        %v1479 = vmul.f32 %v1253, 1.442695
        %v1480 = vpow.pop %v1479
        %v1481 = vmul.f32 %v1254, 1.442695
        %v1482 = vpow.pop %v1481
        %v1483 = vmul.f32 %v1255, 1.442695
        %v1484 = vpow.pop %v1483
        %v1485 = vmul.f32 %v1256, 1.442695
        %v1486 = vpow.pop %v1485
        %v1487 = vmul.f32 %v1257, 1.442695
        %v1488 = vpow.pop %v1487
        %v1489 = vmul.f32 %v1258, 1.442695
        %v1490 = vpow.pop %v1489
        %v1491 = vmul.f32 %v1259, 1.442695
        %v1492 = vpow.pop %v1491
        %v1493 = vmul.f32 %v1260, 1.442695
        %v1494 = vpow.pop %v1493
        %v1495 = vmul.f32 %v1261, 1.442695
        %v1496 = vpow.pop %v1495
        %v1497 = vmul.f32 %v1262, 1.442695
        %v1498 = vpow.pop %v1497
        %v1499 = vmul.f32 %v1263, 1.442695
        %v1500 = vpow.pop %v1499
        %v1501 = vmul.f32 %v1264, 1.442695
        %v1502 = vpow.pop %v1501
        %v1503 = vmul.f32 %v1265, 1.442695
        %v1504 = vpow.pop %v1503
        %v1505 = vmul.f32 %v1266, 1.442695
        %v1506 = vpow.pop %v1505
        %v1507 = vmul.f32 %v1267, 1.442695
        %v1508 = vpow.pop %v1507
        %v1509 = vmul.f32 %v1268, 1.442695
        %v1510 = vpow.pop %v1509
        %v1511 = vmul.f32 %v1269, 1.442695
        %v1512 = vpow.pop %v1511
        %v1513 = vmul.f32 %v1270, 1.442695
        %v1514 = vpow.pop %v1513
        %v1515 = vmul.f32 %v1271, 1.442695
        %v1516 = vpow.pop %v1515
        %v1517 = vmul.f32 %v1272, 1.442695
        %v1518 = vpow.pop %v1517
        %v1519 = vmul.f32 %v1273, 1.442695
        %v1520 = vpow.pop %v1519
        %v1521 = vmul.f32 %v1274, 1.442695
        %v1522 = vpow.pop %v1521
        %v1523 = vmul.f32 %v1275, 1.442695
        %v1524 = vpow.pop %v1523
        %v1525 = vmul.f32 %v1276, 1.442695
        %v1526 = vpow.pop %v1525
        %v1527 = vmul.f32 %v1277, 1.442695
        %v1528 = vpow.pop %v1527
        %v1529 = vmul.f32 %v1278, 1.442695
        %v1530 = vpow.pop %v1529
        %v1531 = vmul.f32 %v1279, 1.442695
        %v1532 = vpow.pop %v1531
        %v1533 = vmul.f32 %v1280, 1.442695
        %v1534 = vpow.pop %v1533
        %v1535 = vmul.f32 %v1281, 1.442695
        %v1536 = vpow.pop %v1535
        %v1537 = vmul.f32 %v1282, 1.442695
        %v1538 = vpow.pop %v1537
        %v1539 = vpack.c.bf16 %v1292, %v1284
        %v1540 = vpack.c.bf16 %v1294, %v1286
        %v1541 = vpack.c.bf16 %v1296, %v1288
        %v1542 = vpack.c.bf16 %v1298, %v1290
        %v1543 = vpack.c.bf16 %v1308, %v1300
        %v1544 = vpack.c.bf16 %v1310, %v1302
        %v1545 = vpack.c.bf16 %v1312, %v1304
        %v1546 = vpack.c.bf16 %v1314, %v1306
        %v1547 = vpack.c.bf16 %v1324, %v1316
        %v1548 = vpack.c.bf16 %v1326, %v1318
        %v1549 = vpack.c.bf16 %v1328, %v1320
        %v1550 = vpack.c.bf16 %v1330, %v1322
        %v1551 = vpack.c.bf16 %v1340, %v1332
        %v1552 = vpack.c.bf16 %v1342, %v1334
        %v1553 = vpack.c.bf16 %v1344, %v1336
        %v1554 = vpack.c.bf16 %v1346, %v1338
        %v1555 = vpack.c.bf16 %v1356, %v1348
        %v1556 = vpack.c.bf16 %v1358, %v1350
        %v1557 = vpack.c.bf16 %v1360, %v1352
        %v1558 = vpack.c.bf16 %v1362, %v1354
        %v1559 = vpack.c.bf16 %v1372, %v1364
        %v1560 = vpack.c.bf16 %v1374, %v1366
        %v1561 = vpack.c.bf16 %v1376, %v1368
        %v1562 = vpack.c.bf16 %v1378, %v1370
        %v1563 = vpack.c.bf16 %v1388, %v1380
        %v1564 = vpack.c.bf16 %v1390, %v1382
        %v1565 = vpack.c.bf16 %v1392, %v1384
        %v1566 = vpack.c.bf16 %v1394, %v1386
        %v1567 = vpack.c.bf16 %v1404, %v1396
        %v1568 = vpack.c.bf16 %v1406, %v1398
        %v1569 = vpack.c.bf16 %v1408, %v1400
        %v1570 = vpack.c.bf16 %v1410, %v1402
        %v1571 = vpack.c.bf16 %v1420, %v1412
        %v1572 = vpack.c.bf16 %v1422, %v1414
        %v1573 = vpack.c.bf16 %v1424, %v1416
        %v1574 = vpack.c.bf16 %v1426, %v1418
        %v1575 = vpack.c.bf16 %v1436, %v1428
        %v1576 = vpack.c.bf16 %v1438, %v1430
        %v1577 = vpack.c.bf16 %v1440, %v1432
        %v1578 = vpack.c.bf16 %v1442, %v1434
        %v1579 = vpack.c.bf16 %v1452, %v1444
        %v1580 = vpack.c.bf16 %v1454, %v1446
        %v1581 = vpack.c.bf16 %v1456, %v1448
        %v1582 = vpack.c.bf16 %v1458, %v1450
        %v1583 = vpack.c.bf16 %v1468, %v1460
        %v1584 = vpack.c.bf16 %v1470, %v1462
        %v1585 = vpack.c.bf16 %v1472, %v1464
        %v1586 = vpack.c.bf16 %v1474, %v1466
        %v1587 = vpack.c.bf16 %v1484, %v1476
        %v1588 = vpack.c.bf16 %v1486, %v1478
        %v1589 = vpack.c.bf16 %v1488, %v1480
        %v1590 = vpack.c.bf16 %v1490, %v1482
        %v1591 = vpack.c.bf16 %v1500, %v1492
        %v1592 = vpack.c.bf16 %v1502, %v1494
        %v1593 = vpack.c.bf16 %v1504, %v1496
        %v1594 = vpack.c.bf16 %v1506, %v1498
        %v1595 = vpack.c.bf16 %v1516, %v1508
        %v1596 = vpack.c.bf16 %v1518, %v1510
        %v1597 = vpack.c.bf16 %v1520, %v1512
        %v1598 = vpack.c.bf16 %v1522, %v1514
        %v1599 = vpack.c.bf16 %v1532, %v1524
        %v1600 = vpack.c.bf16 %v1534, %v1526
        %v1601 = vpack.c.bf16 %v1536, %v1528
        %v1602 = vpack.c.bf16 %v1538, %v1530
        %v1603 = vld [vmem:[%s329] sm:$0xff]
        %v1604 = vld [vmem:[%s329 + $0x8] sm:$0xff]
        %v1605 = vld [vmem:[%s329 + $0x10] sm:$0x11]
        %v1609 = vunpack.c.l.b16 %v1603
        %v1610 = vunpack.c.h.b16 %v1603
        %v1611 = vunpack.c.l.b16 %v1604
        %v1612 = vunpack.c.h.b16 %v1604
        %v1613 = vunpack.c.l.b16 %v1605
        %v1614 = vunpack.c.h.b16 %v1605
        %v1615 = vpack.c.b16 %v1611, %v1609
        %v1616 = vpack.c.b16 %v1612, %v1610
        %v1617 = vpack.c.b16 %v1613, %v1613
        %v1618 = vpack.c.b16 %v1614, %v1614
        %1623 = vmatprep.subr.bf16.mxu0 %v1540
        %1624 = vmatpush1.bf16.msra.mxu0 %v1539
        %1625 = vmatprep.subr.bf16.mxu0 %v1544
        %1626 = vmatpush1.bf16.msra.mxu0 %v1543
        %1627 = vmatprep.subr.bf16.mxu0 %v1548
        %1628 = vmatpush1.bf16.msra.mxu0 %v1547
        %1629 = vmatprep.subr.bf16.mxu0 %v1552
        %1630 = vmatpush1.bf16.msra.mxu0 %v1551
        %1631 = vmatprep.subr.bf16.mxu0 %v1556
        %1632 = vmatpush1.bf16.msra.mxu0 %v1555
        %1633 = vmatprep.subr.bf16.mxu0 %v1560
        %1634 = vmatpush1.bf16.msra.mxu0 %v1559
        %1635 = vmatprep.subr.bf16.mxu0 %v1564
        %1636 = vmatpush1.bf16.msra.mxu0 %v1563
        %1637 = vmatprep.subr.bf16.mxu0 %v1568
        %1638 = vmatpush1.bf16.msra.mxu0 %v1567
        %1639 = vmatprep.subr.bf16.mxu0 %v1572
        %1640 = vmatpush1.bf16.msra.mxu0 %v1571
        %1641 = vmatprep.subr.bf16.mxu0 %v1576
        %1642 = vmatpush1.bf16.msra.mxu0 %v1575
        %1643 = vmatprep.subr.bf16.mxu0 %v1580
        %1644 = vmatpush1.bf16.msra.mxu0 %v1579
        %1645 = vmatprep.subr.bf16.mxu0 %v1584
        %1646 = vmatpush1.bf16.msra.mxu0 %v1583
        %1647 = vmatprep.subr.bf16.mxu0 %v1588
        %1648 = vmatpush1.bf16.msra.mxu0 %v1587
        %1649 = vmatprep.subr.bf16.mxu0 %v1592
        %1650 = vmatpush1.bf16.msra.mxu0 %v1591
        %1651 = vmatprep.subr.bf16.mxu0 %v1596
        %1652 = vmatpush1.bf16.msra.mxu0 %v1595
        %1653 = vmatprep.subr.bf16.mxu0 %v1600
        %1654 = vmatpush1.bf16.msra.mxu0 %v1599
        %1655 = vmatprep.mubr.bf16.mxu0 %v1616
        %1656 = vmatmul.mubr.bf16.gmra.mrb[0].mxu0 %v1615
        %v1657 = vpop.f32.mrb[0].mxu0
        %v1658 = vadd.f32 0.0, %v1657
        %v1659 = vpop.f32.mrb[0].mxu0
        %v1660 = vadd.f32 0.0, %v1659
        %v1661 = vpop.f32.mrb[0].mxu0
        %v1662 = vadd.f32 0.0, %v1661
        %v1663 = vpop.f32.mrb[0].mxu0
        %v1664 = vadd.f32 0.0, %v1663
        %1665 = vmatprep.mubr.bf16.mxu0 %v1618
        %1666 = vmatmul.mubr.bf16.gmra.mrb[0].mxu0 %v1617
        %v1667 = vpop.f32.mrb[0].mxu0
        %v1668 = vadd.f32 0.0, %v1667
        %v1669 = vpop.f32.mrb[0].mxu0
        %v1670 = vadd.f32 0.0, %v1669
        %v1671 = vpop.f32.mrb[0].mxu0
        %v1672 = vpop.f32.mrb[0].mxu0
        %1673 = vdwg.mxu0
        %1674 = vmatprep.subr.bf16.mxu0 %v1542
        %1675 = vmatpush1.bf16.msra.mxu0 %v1541
        %1676 = vmatprep.subr.bf16.mxu0 %v1546
        %1677 = vmatpush1.bf16.msra.mxu0 %v1545
        %1678 = vmatprep.subr.bf16.mxu0 %v1550
        %1679 = vmatpush1.bf16.msra.mxu0 %v1549
        %1680 = vmatprep.subr.bf16.mxu0 %v1554
        %1681 = vmatpush1.bf16.msra.mxu0 %v1553
        %1682 = vmatprep.subr.bf16.mxu0 %v1558
        %1683 = vmatpush1.bf16.msra.mxu0 %v1557
        %1684 = vmatprep.subr.bf16.mxu0 %v1562
        %1685 = vmatpush1.bf16.msra.mxu0 %v1561
        %1686 = vmatprep.subr.bf16.mxu0 %v1566
        %1687 = vmatpush1.bf16.msra.mxu0 %v1565
        %1688 = vmatprep.subr.bf16.mxu0 %v1570
        %1689 = vmatpush1.bf16.msra.mxu0 %v1569
        %1690 = vmatprep.subr.bf16.mxu0 %v1574
        %1691 = vmatpush1.bf16.msra.mxu0 %v1573
        %1692 = vmatprep.subr.bf16.mxu0 %v1578
        %1693 = vmatpush1.bf16.msra.mxu0 %v1577
        %1694 = vmatprep.subr.bf16.mxu0 %v1582
        %1695 = vmatpush1.bf16.msra.mxu0 %v1581
        %1696 = vmatprep.subr.bf16.mxu0 %v1586
        %1697 = vmatpush1.bf16.msra.mxu0 %v1585
        %1698 = vmatprep.subr.bf16.mxu0 %v1590
        %1699 = vmatpush1.bf16.msra.mxu0 %v1589
        %1700 = vmatprep.subr.bf16.mxu0 %v1594
        %1701 = vmatpush1.bf16.msra.mxu0 %v1593
        %1702 = vmatprep.subr.bf16.mxu0 %v1598
        %1703 = vmatpush1.bf16.msra.mxu0 %v1597
        %1704 = vmatprep.subr.bf16.mxu0 %v1602
        %1705 = vmatpush1.bf16.msra.mxu0 %v1601
        %1706 = vmatprep.mubr.bf16.mxu0 %v1616
        %1707 = vmatmul.mubr.bf16.gmra.mrb[0].mxu0 %v1615
        %v1708 = vpop.f32.mrb[0].mxu0
        %v1709 = vadd.f32 0.0, %v1708
        %v1710 = vpop.f32.mrb[0].mxu0
        %v1711 = vadd.f32 0.0, %v1710
        %v1712 = vpop.f32.mrb[0].mxu0
        %v1713 = vadd.f32 0.0, %v1712
        %v1714 = vpop.f32.mrb[0].mxu0
        %v1715 = vadd.f32 0.0, %v1714
        %1716 = vmatprep.mubr.bf16.mxu0 %v1618
        %1717 = vmatmul.mubr.bf16.gmra.mrb[0].mxu0 %v1617
        %v1718 = vpop.f32.mrb[0].mxu0
        %v1719 = vadd.f32 0.0, %v1718
        %v1720 = vpop.f32.mrb[0].mxu0
        %v1721 = vadd.f32 0.0, %v1720
        %v1722 = vpop.f32.mrb[0].mxu0
        %v1723 = vpop.f32.mrb[0].mxu0
        %1724 = vdwg.mxu0
        %v1725 = vrcp.pop %v1668
        %v1726 = vrcp.pop %v1670
        %v1727 = vrcp.pop %v1719
        %v1728 = vrcp.pop %v1721
        %v1729 = vlaneseq
        %v1730 = vshrl.u32 %v1729, 7
        %v1731 = vsub.s32 0, %v1730
        %v1732 = vrot.slane %v1725, %v1731
        %v1733 = vlaneseq
        %v1734 = vshrl.u32 %v1733, 7
        %v1735 = vsub.s32 0, %v1734
        %v1736 = vrot.slane %v1726, %v1735
        %v1737 = vlaneseq
        %v1738 = vshrl.u32 %v1737, 7
        %v1739 = vsub.s32 0, %v1738
        %v1740 = vrot.slane %v1727, %v1739
        %v1741 = vlaneseq
        %v1742 = vshrl.u32 %v1741, 7
        %v1743 = vsub.s32 0, %v1742
        %v1744 = vrot.slane %v1728, %v1743
        %v1745 = vmul.f32 %v1658, %v1732
        %v1746 = vmul.f32 %v1660, %v1736
        %v1747 = vmul.f32 %v1709, %v1740
        %v1748 = vmul.f32 %v1711, %v1744
        %v1749 = vmul.f32 %v1662, %v1732
        %v1750 = vmul.f32 %v1664, %v1736
        %v1751 = vmul.f32 %v1713, %v1740
        %v1752 = vmul.f32 %v1715, %v1744
        %v1753 = vld [vmem:[%s4] sm:$0xf]
        %v1754 = vld [vmem:[%s4 + $0x4] sm:$0xf]
        %v1755 = vld [vmem:[%s4 + $0x8] sm:$0xf]
        %v1756 = vld [vmem:[%s4 + $0xc] sm:$0xf]
        %v1757 = vpack.c.bf16 %v1749, %v1745
        %v1758 = vpack.c.bf16 %v1750, %v1746
        %v1759 = vpack.c.bf16 %v1751, %v1747
        %v1760 = vpack.c.bf16 %v1752, %v1748
        %v1765 = vunpack.c.l.b16 %v1753
        %v1766 = vunpack.c.l.b16 %v1754
        %v1767 = vunpack.c.l.b16 %v1755
        %v1768 = vunpack.c.l.b16 %v1756
        %v1769 = vpack.c.b16 %v1766, %v1765
        %v1770 = vpack.c.b16 %v1768, %v1767
        %vm1771 = vcmask 130048
        %v1773 = vsel %vm1771, %v1769, 0
        %v1776 = vsel %vm1771, %v1770, 0
        %1778 = vmatprep.subr.bf16.mxu0 %v1758
        %1779 = vmatpush1.bf16.msra.mxu0 %v1757
        %1780 = vmatprep.subr.bf16.mxu0 0
        %1781 = vmatpush1.bf16.msra.mxu0 0
        %1782 = vmatprep.subr.bf16.mxu0 0
        %1783 = vmatpush1.bf16.msra.mxu0 0
        %1784 = vmatprep.subr.bf16.mxu0 0
        %1785 = vmatpush1.bf16.msra.mxu0 0
        %1786 = vmatprep.subr.bf16.mxu0 0
        %1787 = vmatpush1.bf16.msra.mxu0 0
        %1788 = vmatprep.subr.bf16.mxu0 0
        %1789 = vmatpush1.bf16.msra.mxu0 0
        %1790 = vmatprep.subr.bf16.mxu0 0
        %1791 = vmatpush1.bf16.msra.mxu0 0
        %1792 = vmatprep.subr.bf16.mxu0 0
        %1793 = vmatpush1.bf16.msra.mxu0 0
        %1794 = vmatprep.subr.bf16.mxu0 0
        %1795 = vmatpush1.bf16.msra.mxu0 0
        %1796 = vmatprep.subr.bf16.mxu0 0
        %1797 = vmatpush1.bf16.msra.mxu0 0
        %1798 = vmatprep.subr.bf16.mxu0 0
        %1799 = vmatpush1.bf16.msra.mxu0 0
        %1800 = vmatprep.subr.bf16.mxu0 0
        %1801 = vmatpush1.bf16.msra.mxu0 0
        %1802 = vmatprep.subr.bf16.mxu0 0
        %1803 = vmatpush1.bf16.msra.mxu0 0
        %1804 = vmatprep.subr.bf16.mxu0 0
        %1805 = vmatpush1.bf16.msra.mxu0 0
        %1806 = vmatprep.subr.bf16.mxu0 0
        %1807 = vmatpush1.bf16.msra.mxu0 0
        %1808 = vmatprep.subr.bf16.mxu0 0
        %1809 = vmatpush1.bf16.msra.mxu0 0
        %1810 = vmatprep.mubr.bf16.mxu0 0
        %1811 = vmatmul.mubr.bf16.gmra.mrb[0].mxu0 %v1773
        %v1812 = vpop.f32.mrb[0].mxu0
        %v1813 = vadd.f32 0.0, %v1812
        %v1814 = vpop.f32.mrb[0].mxu0
        %v1815 = vadd.f32 0.0, %v1814
        %v1816 = vpop.f32.mrb[0].mxu0
        %v1817 = vadd.f32 0.0, %v1816
        %v1818 = vpop.f32.mrb[0].mxu0
        %v1819 = vadd.f32 0.0, %v1818
        %1820 = vmatprep.mubr.bf16.mxu0 0
        %1821 = vmatmul.mubr.bf16.gmra.mrb[0].mxu0 %v1776
        %v1822 = vpop.f32.mrb[0].mxu0
        %v1823 = vadd.f32 0.0, %v1822
        %v1824 = vpop.f32.mrb[0].mxu0
        %v1825 = vadd.f32 0.0, %v1824
        %v1826 = vpop.f32.mrb[0].mxu0
        %v1827 = vadd.f32 0.0, %v1826
        %v1828 = vpop.f32.mrb[0].mxu0
        %v1829 = vadd.f32 0.0, %v1828
        %1830 = vdwg.mxu0
        %1831 = vmatprep.subr.bf16.mxu0 %v1760
        %1832 = vmatpush1.bf16.msra.mxu0 %v1759
        %1833 = vmatprep.subr.bf16.mxu0 0
        %1834 = vmatpush1.bf16.msra.mxu0 0
        %1835 = vmatprep.subr.bf16.mxu0 0
        %1836 = vmatpush1.bf16.msra.mxu0 0
        %1837 = vmatprep.subr.bf16.mxu0 0
        %1838 = vmatpush1.bf16.msra.mxu0 0
        %1839 = vmatprep.subr.bf16.mxu0 0
        %1840 = vmatpush1.bf16.msra.mxu0 0
        %1841 = vmatprep.subr.bf16.mxu0 0
        %1842 = vmatpush1.bf16.msra.mxu0 0
        %1843 = vmatprep.subr.bf16.mxu0 0
        %1844 = vmatpush1.bf16.msra.mxu0 0
        %1845 = vmatprep.subr.bf16.mxu0 0
        %1846 = vmatpush1.bf16.msra.mxu0 0
        %1847 = vmatprep.subr.bf16.mxu0 0
        %1848 = vmatpush1.bf16.msra.mxu0 0
        %1849 = vmatprep.subr.bf16.mxu0 0
        %1850 = vmatpush1.bf16.msra.mxu0 0
        %1851 = vmatprep.subr.bf16.mxu0 0
        %1852 = vmatpush1.bf16.msra.mxu0 0
        %1853 = vmatprep.subr.bf16.mxu0 0
        %1854 = vmatpush1.bf16.msra.mxu0 0
        %1855 = vmatprep.subr.bf16.mxu0 0
        %1856 = vmatpush1.bf16.msra.mxu0 0
        %1857 = vmatprep.subr.bf16.mxu0 0
        %1858 = vmatpush1.bf16.msra.mxu0 0
        %1859 = vmatprep.subr.bf16.mxu0 0
        %1860 = vmatpush1.bf16.msra.mxu0 0
        %1861 = vmatprep.subr.bf16.mxu0 0
        %1862 = vmatpush1.bf16.msra.mxu0 0
        %1863 = vmatprep.mubr.bf16.mxu0 0
        %1864 = vmatmul.mubr.bf16.gmra.mrb[0].mxu0 %v1773
        %v1865 = vpop.f32.mrb[0].mxu0
        %v1866 = vadd.f32 0.0, %v1865
        %v1867 = vpop.f32.mrb[0].mxu0
        %v1868 = vadd.f32 0.0, %v1867
        %v1869 = vpop.f32.mrb[0].mxu0
        %v1870 = vadd.f32 0.0, %v1869
        %v1871 = vpop.f32.mrb[0].mxu0
        %v1872 = vadd.f32 0.0, %v1871
        %1873 = vmatprep.mubr.bf16.mxu0 0
        %1874 = vmatmul.mubr.bf16.gmra.mrb[0].mxu0 %v1776
        %v1875 = vpop.f32.mrb[0].mxu0
        %v1876 = vadd.f32 0.0, %v1875
        %v1877 = vpop.f32.mrb[0].mxu0
        %v1878 = vadd.f32 0.0, %v1877
        %v1879 = vpop.f32.mrb[0].mxu0
        %v1880 = vadd.f32 0.0, %v1879
        %v1881 = vpop.f32.mrb[0].mxu0
        %v1882 = vadd.f32 0.0, %v1881
        %1883 = vdwg.mxu0
        %s1884 = sld [smem:[#allocation2]]
        %v1885 = vstv %s1884
        %v1886 = vmul.f32 %v1885, %v1813
        %v1887 = vmul.f32 %v1885, %v1815
        %v1888 = vmul.f32 %v1885, %v1866
        %v1889 = vmul.f32 %v1885, %v1868
        %v1890 = vmul.f32 %v1885, %v1817
        %v1891 = vmul.f32 %v1885, %v1819
        %v1892 = vmul.f32 %v1885, %v1870
        %v1893 = vmul.f32 %v1885, %v1872
        %v1894 = vmul.f32 %v1885, %v1823
        %v1895 = vmul.f32 %v1885, %v1825
        %v1896 = vmul.f32 %v1885, %v1876
        %v1897 = vmul.f32 %v1885, %v1878
        %v1898 = vmul.f32 %v1885, %v1827
        %v1899 = vmul.f32 %v1885, %v1829
        %v1900 = vmul.f32 %v1885, %v1880
        %v1901 = vmul.f32 %v1885, %v1882
        %v1902 = vadd.f32 %v332, %v1886
        %v1903 = vadd.f32 %v333, %v1887
        %v1904 = vadd.f32 %v334, %v1888
        %v1905 = vadd.f32 %v335, %v1889
        %v1906 = vadd.f32 %v336, %v1890
        %v1907 = vadd.f32 %v337, %v1891
        %v1908 = vadd.f32 %v338, %v1892
        %v1909 = vadd.f32 %v339, %v1893
        %v1910 = vadd.f32 %v340, %v1894
        %v1911 = vadd.f32 %v341, %v1895
        %v1912 = vadd.f32 %v342, %v1896
        %v1913 = vadd.f32 %v343, %v1897
        %v1914 = vadd.f32 %v344, %v1898
        %v1915 = vadd.f32 %v345, %v1899
        %v1916 = vadd.f32 %v346, %v1900
        %v1917 = vadd.f32 %v347, %v1901
        %1918 = vst [vmem:[%s318] sm:$0xff] %v1902
        %1919 = vst [vmem:[%s318 + $0x8] sm:$0xff] %v1903
        %1920 = vst [vmem:[%s318 + $0x10] sm:$0xff] %v1904
        %1921 = vst [vmem:[%s318 + $0x18] sm:$0xff] %v1905
        %1922 = vst [vmem:[%s318 + $0x20] sm:$0xff] %v1906
        %1923 = vst [vmem:[%s318 + $0x28] sm:$0xff] %v1907
        %1924 = vst [vmem:[%s318 + $0x30] sm:$0xff] %v1908
        %1925 = vst [vmem:[%s318 + $0x38] sm:$0xff] %v1909
        %1926 = vst [vmem:[%s318 + $0x40] sm:$0xff] %v1910
        %1927 = vst [vmem:[%s318 + $0x48] sm:$0xff] %v1911
        %1928 = vst [vmem:[%s318 + $0x50] sm:$0xff] %v1912
        %1929 = vst [vmem:[%s318 + $0x58] sm:$0xff] %v1913
        %1930 = vst [vmem:[%s318 + $0x60] sm:$0xff] %v1914
        %1931 = vst [vmem:[%s318 + $0x68] sm:$0xff] %v1915
        %1932 = vst [vmem:[%s318 + $0x70] sm:$0xff] %v1916
        %1933 = vst [vmem:[%s318 + $0x78] sm:$0xff] %v1917
        %s1934 = sand.u32 %s189, 1
        %s1935 = scalar_lea.sflag [#allocation5], %s1934
        %s1936 = sand.u32 %s189, 1
        %s1937 = smul.addr %s1936, 128
        %s1938 = scalar_lea.vmem [#allocation6], %s1937
        // Predicated region
        $region49: #{tpu_custom_call.1} parent=43 // pred_check
          %p1939 = pneg %p199
        $region50: #{tpu_custom_call.1} parent=43 // pred_check_branch
          %1941 = sbr.rel (%p1939) target = $region52
        $region51: #{tpu_custom_call.1} parent=43 // pred_region
          %s1942 = smul.u32 4, %s29
          %s1944 = ssub.s32 2048, 2048
          %1945 = vsyncadd %s1935, %s1944
          %s1946 = smul.addr %s28, 32
          %s1947 = sadd.s32 %s1942, %s1946
          %s1948 = smul.addr %s1947, 128
          %s1949 = scalar_lea.hbm %s6, %s1948
          %s1950 = sshll.u32 %s1938, 4
          %s1951 = int_to_ptr.vmem [resolvable:$true] %s1950
          %1956 = dma.vmem_to_hbm [thread:$0]  %s1951, 2048, %s1949, %s1935, 512, 1024, 32
        $region52: #{tpu_custom_call.1} parent=43 // pred_fallthru
          _
      $region44: #{tpu_custom_call.1} parent=5 // pred_fallthru
        _
      %p1957 = scmp.le.s32.totalorder 2, %s19
      // Predicated region
      $region53: #{tpu_custom_call.1} parent=5 // pred_check
        %p1958 = pneg %p1957
      $region54: #{tpu_custom_call.1} parent=5 // pred_check_branch
        %1960 = sbr.rel (%p1958) target = $region56
      $region55: #{tpu_custom_call.1} parent=5 // pred_region
        %s1961 = ssub.s32 %s19, 2
        // Predicated region
        $region57: #{tpu_custom_call.1} parent=55 // pred_check
          %p1962 = pneg %p205
        $region58: #{tpu_custom_call.1} parent=55 // pred_check_branch
          %1964 = sbr.rel (%p1962) target = $region60
        $region59: #{tpu_custom_call.1} parent=55 // pred_region
          %s1965 = sand.u32 %s190, 1
          %s1966 = scalar_lea.sflag [#allocation5], %s1965
          %s1967 = sand.u32 %s190, 1
          %s1968 = smul.addr %s1967, 128
          %s1969 = scalar_lea.vmem [#allocation6], %s1968
          %1970 = dma.done %s1966, 2048
        $region60: #{tpu_custom_call.1} parent=55 // pred_fallthru
          _
      $region56: #{tpu_custom_call.1} parent=5 // pred_fallthru
        _
    $region6: #{tpu_custom_call.1} parent=1 // loop_footer
      %s23 = sadd.s32 1, %s19
    $region7: #{tpu_custom_call.1} parent=1 // loop_footer_branch
      %18 = sbr.rel target = $region3
    $region8: #{tpu_custom_call.1} parent=1 // loop_exit
      _
    %1971 = vsyncpa [#allocation4], 1
    %s1972 = scalar_lea.sflag [#allocation4], 1
    %1973 = vsyncpa %s1972, 1
    %1974 = vsyncpa [#allocation5], 1
    %s1975 = scalar_lea.sflag [#allocation5], 1
    %1976 = vsyncpa %s1975, 1

</llo_original>
